<compile_context>
chip_gen: v7x
topology: tpu7x:2x2x1
jax: 0.10.0
libtpu: 0.0.40
codegen_flags: <defaults>
</compile_context>

<pallas_src>
import functools

import jax
import jax.numpy as jnp
import numpy as np
from jax.experimental import pallas as pl
from jax.experimental.pallas import tpu as pltpu


_VMEM_LIMIT = 32 * 1024 * 1024     # conservative: fits v5e/v6e (128 MiB) and v7x (64 MiB)


def _silu(x):
    return x * jax.nn.sigmoid(x)


def _round_up(x, m):
    return ((x + m - 1) // m) * m


# ---------------------------------------------------------------------------
# Kernel 1: 1x1 conv (pointwise) + folded-BN bias + SiLU == channel matmul.
# ---------------------------------------------------------------------------
def _pw_kernel(x_ref, w_ref, b_ref, o_ref):
    # x_ref: (1, C1, TCOL)  w_ref: (c_, C1)  b_ref: (c_, 1)  o_ref: (1, c_, TCOL)
    acc = jnp.dot(w_ref[...], x_ref[0], preferred_element_type=jnp.float32)
    acc = acc + b_ref[...].astype(jnp.float32)
    o_ref[0] = _silu(acc).astype(o_ref.dtype)


def _pointwise(x3, w_eff, bias, c_out):
    """(B, C1, HW) -> y (B, c_, HW)."""
    B, C1, HW = x3.shape
    if HW <= 128:
        tcol = HW                                   # full extent (allowed block shape)
    else:
        tcol = min(1024, (HW // 128) * 128)         # lane-dense 128-multiple tile
        if B == 1 and pl.cdiv(HW, tcol) < 2:
            # Guarantee >= 2 parallel steps so both v7x TensorCores get work.
            tcol = max(128, (pl.cdiv(HW, 2) // 128) * 128)
    n_col = pl.cdiv(HW, tcol)

    return pl.pallas_call(
        _pw_kernel,
        out_shape=jax.ShapeDtypeStruct((B, c_out, HW), x3.dtype),
        grid=(B, n_col),
        in_specs=[
            pl.BlockSpec((1, C1, tcol), lambda b, j: (b, 0, j)),
            pl.BlockSpec((c_out, C1), lambda b, j: (0, 0)),
            pl.BlockSpec((c_out, 1), lambda b, j: (0, 0)),
        ],
        out_specs=pl.BlockSpec((1, c_out, tcol), lambda b, j: (b, 0, j)),
        compiler_params=pltpu.CompilerParams(
            dimension_semantics=("parallel", "parallel"),
            vmem_limit_bytes=_VMEM_LIMIT),
    )(x3, w_eff, bias)


# ---------------------------------------------------------------------------
# Kernel 2: depthwise 5x5 'same' conv + folded-BN bias + SiLU, with the cv1
# output passed through to half 0 of the fused output (fused torch.cat).
# ---------------------------------------------------------------------------
def _dw_kernel(y_ref, w_ref, b_ref, o_ref, pad_ref, *, rs):
    # y_ref: (1, C, H, W)   w_ref: (C, 5, 5)   b_ref: (C, 1, 1)
    # o_ref: (1, 2, C, H, W)   pad_ref: (C, Hp, Wp) f32 scratch, data at offset (2, 2)
    C, H, W = y_ref.shape[1], y_ref.shape[2], y_ref.shape[3]
    Wp = pad_ref.shape[2]
    n_strips = H // rs

    # Zero only the 2-wide halo strips that the taps read; the interior is fully
    # overwritten every step (no full-scratch memset).
    pad_ref[:, 0:2, :] = jnp.zeros((C, 2, Wp), jnp.float32)
    pad_ref[:, H + 2:H + 4, :] = jnp.zeros((C, 2, Wp), jnp.float32)
    pad_ref[:, 2:H + 2, 0:2] = jnp.zeros((C, H, 2), jnp.float32)
    pad_ref[:, 2:H + 2, W + 2:W + 4] = jnp.zeros((C, H, 2), jnp.float32)

    # Stage the tile into the scratch and pass y through to half 0 of the output,
    # strip by strip (static slices, bounded live ranges).
    for si in range(n_strips):
        r0 = si * rs
        ys = y_ref[0, :, r0:r0 + rs, :]
        o_ref[0, 0, :, r0:r0 + rs, :] = ys
        pad_ref[:, r0 + 2:r0 + 2 + rs, 2:2 + W] = ys.astype(jnp.float32)

    # Hoisted: one load of the 5x5 weights and the bias per block.
    w = w_ref[...].astype(jnp.float32)                       # (C, 5, 5)
    b = b_ref[...].astype(jnp.float32)                       # (C, 1, 1)
    w_taps = [w[:, kh, kw][:, None, None] for kh in range(5) for kw in range(5)]

    # Row-strip blocked 25-tap accumulation: acc + one band stay vreg-resident.
    def strip(i, carry):
        r0 = pl.multiple_of(i * rs, rs)
        acc = jnp.zeros((C, rs, W), jnp.float32)
        for kh in range(5):
            band = pad_ref[:, pl.ds(r0 + kh, rs), :]          # (C, rs, Wp), lane-aligned
            for kw in range(5):
                acc = acc + band[:, :, kw:kw + W] * w_taps[kh * 5 + kw]
        o_ref[0, 1, :, pl.ds(r0, rs), :] = _silu(acc + b).astype(o_ref.dtype)
        return carry

    jax.lax.fori_loop(0, n_strips, strip, None)


def _pick_c_tile(c_out, batch, h, w, dtype):
    c_tile = c_out
    for cand in (64, 32, 16, 8):
        if c_out % cand == 0:
            c_tile = cand
            break
    # Cap by a VMEM estimate: scratch + double-buffered in/out tiles.
    dt_size = jnp.dtype(dtype).itemsize
    hp = _round_up(h + 4, 8)
    wp = _round_up(w + 4, 128)

    def vmem_bytes(ct):
        return ct * hp * wp * 4 + 2 * (ct * h * w * dt_size + 2 * ct * h * w * dt_size)

    while c_tile > 1 and c_tile % 2 == 0 and vmem_bytes(c_tile) > (_VMEM_LIMIT * 3) // 4:
        c_tile //= 2
    # Keep both v7x TensorCores fed when the batch axis alone can't.
    if batch == 1 and c_out // c_tile < 2 and c_tile % 2 == 0 and c_tile >= 2:
        c_tile //= 2
    return c_tile


def _pick_row_strip(h, w, c_tile):
    # Keep the f32 accumulator + one band + one tap temp roughly inside the
    # 64 x 4 KiB vreg file: c_tile * rs * (2*W + Wp) * 4 bytes <= budget.
    wp = _round_up(w + 4, 128)
    for rs in (16, 8, 4, 2, 1):
        if h % rs == 0 and c_tile * rs * (2 * w + wp) * 4 <= 192 * 1024:
            return rs
    return 1


def _depthwise_fused(y4, w_dw_eff, bias, c_out):
    """y (B, c_, H, W) -> fused (B, 2, c_, H, W) with half0=y, half1=cv2(y)."""
    B, _, H, W = y4.shape
    c_tile = _pick_c_tile(c_out, B, H, W, y4.dtype)
    rs = _pick_row_strip(H, W, c_tile)
    hp = _round_up(H + 4, 8)
    wp = _round_up(W + 4, 128)
    n_cb = c_out // c_tile

    kernel = functools.partial(_dw_kernel, rs=rs)
    return pl.pallas_call(
        kernel,
        out_shape=jax.ShapeDtypeStruct((B, 2, c_out, H, W), y4.dtype),
        grid=(B, n_cb),
        in_specs=[
            pl.BlockSpec((1, c_tile, H, W), lambda b, c: (b, c, 0, 0)),
            pl.BlockSpec((c_tile, 5, 5), lambda b, c: (c, 0, 0)),
            pl.BlockSpec((c_tile, 1, 1), lambda b, c: (c, 0, 0)),
        ],
        out_specs=pl.BlockSpec((1, 2, c_tile, H, W), lambda b, c: (b, 0, c, 0, 0)),
        scratch_shapes=[pltpu.VMEM((c_tile, hp, wp), jnp.float32)],
        compiler_params=pltpu.CompilerParams(
            dimension_semantics=("parallel", "parallel"),
            vmem_limit_bytes=_VMEM_LIMIT),
    )(y4, w_dw_eff, bias)


# ---------------------------------------------------------------------------
# GhostConv forward (NCHW in / NCHW out, matching PyTorch semantics)
# ---------------------------------------------------------------------------
def _ghost_conv_forward(x_nchw, params):
    B, C1, H, W = x_nchw.shape
    c_ = params["w1"].shape[0]
    dtype = x_nchw.dtype
    eps = 1e-5

    # Fold BatchNorm (eval / running stats) into conv weight + bias.
    s1 = params["bn1_gamma"] / jnp.sqrt(params["bn1_var"] + eps)
    b1 = params["bn1_beta"] - params["bn1_mean"] * s1
    w1 = (params["w1"] * s1[:, None]).astype(dtype)                  # (c_, C1)

    s2 = params["bn2_gamma"] / jnp.sqrt(params["bn2_var"] + eps)
    b2 = params["bn2_beta"] - params["bn2_mean"] * s2
    w2 = (params["w_dw"] * s2[:, None, None]).astype(jnp.float32)    # (c_, 5, 5)

    # cv1: 1x1 conv + BN + SiLU (matmul over channels, HW on lanes).
    x3 = x_nchw.reshape(B, C1, H * W)                 # free (contiguous) reshape
    y = _pointwise(x3, w1, b1.astype(jnp.float32).reshape(c_, 1), c_)

    # cv2: depthwise 5x5 + BN + SiLU; y is passed through to half 0 so the
    # channel concat is just the trailing reshape.
    y4 = y.reshape(B, c_, H, W)                       # free reshape
    out5 = _depthwise_fused(y4, w2, b2.astype(jnp.float32).reshape(c_, 1, 1), c_)

    return out5.reshape(B, 2 * c_, H, W)              # free reshape == torch.cat


ghost_conv_forward = jax.jit(_ghost_conv_forward)


# ---------------------------------------------------------------------------
# Plain-JAX reference (for correctness check)
# ---------------------------------------------------------------------------
def ghost_conv_reference(x_nchw, params):
    c_ = params["w1"].shape[0]
    eps = 1e-5

    s1 = params["bn1_gamma"] / jnp.sqrt(params["bn1_var"] + eps)
    b1 = params["bn1_beta"] - params["bn1_mean"] * s1
    y = jax.lax.conv_general_dilated(
        x_nchw, params["w1"][:, :, None, None], (1, 1), "VALID",
        dimension_numbers=("NCHW", "OIHW", "NCHW"))
    y = _silu(y * s1[None, :, None, None] + b1[None, :, None, None])

    s2 = params["bn2_gamma"] / jnp.sqrt(params["bn2_var"] + eps)
    b2 = params["bn2_beta"] - params["bn2_mean"] * s2
    z = jax.lax.conv_general_dilated(
        y, params["w_dw"][:, None, :, :], (1, 1), ((2, 2), (2, 2)),
        dimension_numbers=("NCHW", "OIHW", "NCHW"), feature_group_count=c_)
    z = _silu(z * s2[None, :, None, None] + b2[None, :, None, None])

    return jnp.concatenate([y, z], axis=1)


def init_params(key, c1, c2):
    c_ = c2 // 2
    ks = jax.random.split(key, 10)
    return {
        # cv1.conv weight: PyTorch [c_, c1, 1, 1] stored as (c_, c1)
        "w1": 0.5 * jax.random.normal(ks[0], (c_, c1), jnp.float32),
        "bn1_gamma": 1.0 + 0.1 * jax.random.normal(ks[1], (c_,), jnp.float32),
        "bn1_beta": 0.1 * jax.random.normal(ks[2], (c_,), jnp.float32),
        "bn1_mean": 0.1 * jax.random.normal(ks[3], (c_,), jnp.float32),
        "bn1_var": jnp.abs(jax.random.normal(ks[4], (c_,), jnp.float32)) + 0.5,
        # cv2.conv depthwise weight: PyTorch [c_, 1, 5, 5] stored as (c_, 5, 5)
        "w_dw": 0.2 * jax.random.normal(ks[5], (c_, 5, 5), jnp.float32),
        "bn2_gamma": 1.0 + 0.1 * jax.random.normal(ks[6], (c_,), jnp.float32),
        "bn2_beta": 0.1 * jax.random.normal(ks[7], (c_,), jnp.float32),
        "bn2_mean": 0.1 * jax.random.normal(ks[8], (c_,), jnp.float32),
        "bn2_var": jnp.abs(jax.random.normal(ks[9], (c_,), jnp.float32)) + 0.5,
    }


if __name__ == "__main__":
    key = jax.random.PRNGKey(0)
    kx, kp = jax.random.split(key)

    B, C1, H, W = 2, 4, 16, 16
    C2 = 8                                   # output channels (c_ = 4 per branch)

    x = jax.random.normal(kx, (B, C1, H, W), jnp.float32)   # NCHW input
    params = init_params(kp, C1, C2)

    out = jax.block_until_ready(ghost_conv_forward(x, params))
    ref = jax.block_until_ready(ghost_conv_reference(x, params))

    assert out.shape == (B, C2, H, W), out.shape
    np.testing.assert_allclose(np.asarray(out), np.asarray(ref), rtol=1e-4, atol=1e-4)

    print("KERNEL_OK")
</pallas_src>

<mosaic_0001>
module attributes {stable_mosaic.version = 11 : i64} {
  func.func @_pw_kernel(%arg0: i32, %arg1: i32, %arg2: memref<1x4x256xf32, #tpu.memory_space<vmem>>, %arg3: memref<4x4xf32, #tpu.memory_space<vmem>>, %arg4: memref<4x1xf32, #tpu.memory_space<vmem>>, %arg5: memref<1x4x256xf32, #tpu.memory_space<vmem>>) attributes {dimension_semantics = [#tpu.dimension_semantics<parallel>, #tpu.dimension_semantics<parallel>], iteration_bounds = array<i64: 2, 1>, scalar_prefetch = 0 : i64, scratch_operands = 0 : i64, tpu.core_type = #tpu.core_type<tc>, window_params = [{transform_indices = @transform_0, window_bounds = array<i64: 1, 4, 256>}, {pipeline_mode = #tpu.pipeline_mode<synchronous>, transform_indices = @transform_1, window_bounds = array<i64: 4, 4>}, {pipeline_mode = #tpu.pipeline_mode<synchronous>, transform_indices = @transform_2, window_bounds = array<i64: 4, 1>}, {transform_indices = @transform_3, window_bounds = array<i64: 1, 4, 256>}]} {
    %c0 = arith.constant 0 : index
    %c0_0 = arith.constant 0 : index
    %0 = vector.load %arg3[%c0, %c0_0] : memref<4x4xf32, #tpu.memory_space<vmem>>, vector<4x4xf32>
    %c0_1 = arith.constant 0 : index
    %c0_2 = arith.constant 0 : index
    %c0_3 = arith.constant 0 : index
    %1 = vector.load %arg2[%c0_1, %c0_2, %c0_3] : memref<1x4x256xf32, #tpu.memory_space<vmem>>, vector<1x4x256xf32>
    %2 = vector.shape_cast %1 : vector<1x4x256xf32> to vector<4x256xf32>
    %cst = arith.constant dense<0.000000e+00> : vector<4x256xf32>
    %3 = tpu.matmul %0, %2, %cst {dimension_numbers = #tpu.dot_dimension_numbers<[1], [0], [0], [1], [0, 0, 1, 1], [], []>} : vector<4x4xf32>, vector<4x256xf32>, vector<4x256xf32> -> vector<4x256xf32>
    %c0_4 = arith.constant 0 : index
    %c0_5 = arith.constant 0 : index
    %4 = vector.load %arg4[%c0_4, %c0_5] : memref<4x1xf32, #tpu.memory_space<vmem>>, vector<4x1xf32>
    %5 = vector.broadcast %4 : vector<4x1xf32> to vector<4x256xf32>
    %6 = arith.addf %3, %5 : vector<4x256xf32>
    %7 = arith.negf %6 : vector<4x256xf32>
    %8 = math.exp %7 : vector<4x256xf32>
    %cst_6 = arith.constant 1.000000e+00 : f32
    %9 = vector.broadcast %cst_6 : f32 to vector<4x256xf32>
    %10 = arith.addf %9, %8 : vector<4x256xf32>
    %11 = arith.divf %9, %10 : vector<4x256xf32>
    %12 = arith.mulf %6, %11 : vector<4x256xf32>
    %c0_7 = arith.constant 0 : index
    %c0_8 = arith.constant 0 : index
    %c0_9 = arith.constant 0 : index
    %13 = vector.load %arg5[%c0_7, %c0_8, %c0_9] : memref<1x4x256xf32, #tpu.memory_space<vmem>>, vector<1x4x256xf32>
    %14 = vector.shape_cast %13 : vector<1x4x256xf32> to vector<4x256xf32>
    %15 = vector.shape_cast %12 : vector<4x256xf32> to vector<1x4x256xf32>
    tpu.vector_store %arg5[%c0_7, %c0_8, %c0_9], %15 {strides = array<i32>} : memref<1x4x256xf32, #tpu.memory_space<vmem>>, vector<1x4x256xf32>,
    return
  }
  func.func @transform_0(%arg0: i32, %arg1: i32) -> (i32, i32, i32) {
    %c0_i32 = arith.constant 0 : i32
    %c0_i32_0 = arith.constant 0 : i32
    return %arg0, %c0_i32, %arg1 : i32, i32, i32
  }
  func.func @transform_1(%arg0: i32, %arg1: i32) -> (i32, i32) {
    %c0_i32 = arith.constant 0 : i32
    %c0_i32_0 = arith.constant 0 : i32
    %c0_i32_1 = arith.constant 0 : i32
    return %c0_i32, %c0_i32_0 : i32, i32
  }
  func.func @transform_2(%arg0: i32, %arg1: i32) -> (i32, i32) {
    %c0_i32 = arith.constant 0 : i32
    %c0_i32_0 = arith.constant 0 : i32
    %c0_i32_1 = arith.constant 0 : i32
    return %c0_i32, %c0_i32_0 : i32, i32
  }
  func.func @transform_3(%arg0: i32, %arg1: i32) -> (i32, i32, i32) {
    %c0_i32 = arith.constant 0 : i32
    %c0_i32_0 = arith.constant 0 : i32
    return %arg0, %c0_i32, %arg1 : i32, i32, i32
  }
}

module attributes {stable_mosaic.version = 11 : i64} {
  func.func @_dw_kernel(%arg0: i32, %arg1: i32, %arg2: memref<1x4x16x16xf32, #tpu.memory_space<vmem>>, %arg3: memref<4x5x5xf32, #tpu.memory_space<vmem>>, %arg4: memref<4x1x1xf32, #tpu.memory_space<vmem>>, %arg5: memref<1x2x4x16x16xf32, #tpu.memory_space<vmem>>, %arg6: memref<4x24x128xf32, #tpu.memory_space<vmem>>) attributes {dimension_semantics = [#tpu.dimension_semantics<parallel>, #tpu.dimension_semantics<parallel>], iteration_bounds = array<i64: 2, 1>, scalar_prefetch = 0 : i64, scratch_operands = 1 : i64, tpu.core_type = #tpu.core_type<tc>, window_params = [{transform_indices = @transform_0, window_bounds = array<i64: 1, 4, 16, 16>}, {transform_indices = @transform_1, window_bounds = array<i64: 4, 5, 5>}, {transform_indices = @transform_2, window_bounds = array<i64: 4, 1, 1>}, {transform_indices = @transform_3, window_bounds = array<i64: 1, 2, 4, 16, 16>}]} {
    %cst = arith.constant 0.000000e+00 : f32
    %0 = vector.broadcast %cst : f32 to vector<4x2x128xf32>
    %c0 = arith.constant 0 : index
    %c0_0 = arith.constant 0 : index
    %c0_1 = arith.constant 0 : index
    %1 = vector.load %arg6[%c0, %c0_0, %c0_1] : memref<4x24x128xf32, #tpu.memory_space<vmem>>, vector<4x2x128xf32>
    tpu.vector_store %arg6[%c0, %c0_0, %c0_1], %0 {strides = array<i32>} : memref<4x24x128xf32, #tpu.memory_space<vmem>>, vector<4x2x128xf32>,
    %cst_2 = arith.constant 0.000000e+00 : f32
    %2 = vector.broadcast %cst_2 : f32 to vector<4x2x128xf32>
    %c0_3 = arith.constant 0 : index
    %c18 = arith.constant 18 : index
    %c0_4 = arith.constant 0 : index
    %3 = vector.load %arg6[%c0_3, %c18, %c0_4] : memref<4x24x128xf32, #tpu.memory_space<vmem>>, vector<4x2x128xf32>
    tpu.vector_store %arg6[%c0_3, %c18, %c0_4], %2 {strides = array<i32>} : memref<4x24x128xf32, #tpu.memory_space<vmem>>, vector<4x2x128xf32>,
    %cst_5 = arith.constant 0.000000e+00 : f32
    %4 = vector.broadcast %cst_5 : f32 to vector<4x16x2xf32>
    %c0_6 = arith.constant 0 : index
    %c2 = arith.constant 2 : index
    %c0_7 = arith.constant 0 : index
    %5 = vector.load %arg6[%c0_6, %c2, %c0_7] : memref<4x24x128xf32, #tpu.memory_space<vmem>>, vector<4x16x2xf32>
    tpu.vector_store %arg6[%c0_6, %c2, %c0_7], %4 {strides = array<i32>} : memref<4x24x128xf32, #tpu.memory_space<vmem>>, vector<4x16x2xf32>,
    %cst_8 = arith.constant 0.000000e+00 : f32
    %6 = vector.broadcast %cst_8 : f32 to vector<4x16x2xf32>
    %c0_9 = arith.constant 0 : index
    %c2_10 = arith.constant 2 : index
    %c18_11 = arith.constant 18 : index
    %7 = vector.load %arg6[%c0_9, %c2_10, %c18_11] : memref<4x24x128xf32, #tpu.memory_space<vmem>>, vector<4x16x2xf32>
    tpu.vector_store %arg6[%c0_9, %c2_10, %c18_11], %6 {strides = array<i32>} : memref<4x24x128xf32, #tpu.memory_space<vmem>>, vector<4x16x2xf32>,
    %c0_12 = arith.constant 0 : index
    %c0_13 = arith.constant 0 : index
    %c0_14 = arith.constant 0 : index
    %c0_15 = arith.constant 0 : index
    %8 = vector.load %arg2[%c0_12, %c0_13, %c0_14, %c0_15] : memref<1x4x16x16xf32, #tpu.memory_space<vmem>>, vector<1x4x16x16xf32>
    %9 = vector.shape_cast %8 : vector<1x4x16x16xf32> to vector<4x16x16xf32>
    %c0_16 = arith.constant 0 : index
    %c0_17 = arith.constant 0 : index
    %c0_18 = arith.constant 0 : index
    %c0_19 = arith.constant 0 : index
    %c0_20 = arith.constant 0 : index
    %10 = vector.load %arg5[%c0_16, %c0_17, %c0_18, %c0_19, %c0_20] : memref<1x2x4x16x16xf32, #tpu.memory_space<vmem>>, vector<1x1x4x16x16xf32>
    %11 = vector.shape_cast %10 : vector<1x1x4x16x16xf32> to vector<4x16x16xf32>
    %12 = vector.shape_cast %9 : vector<4x16x16xf32> to vector<1x1x4x16x16xf32>
    tpu.vector_store %arg5[%c0_16, %c0_17, %c0_18, %c0_19, %c0_20], %12 {strides = array<i32>} : memref<1x2x4x16x16xf32, #tpu.memory_space<vmem>>, vector<1x1x4x16x16xf32>,
    %c0_21 = arith.constant 0 : index
    %c2_22 = arith.constant 2 : index
    %c2_23 = arith.constant 2 : index
    %13 = vector.load %arg6[%c0_21, %c2_22, %c2_23] : memref<4x24x128xf32, #tpu.memory_space<vmem>>, vector<4x16x16xf32>
    tpu.vector_store %arg6[%c0_21, %c2_22, %c2_23], %9 {strides = array<i32>} : memref<4x24x128xf32, #tpu.memory_space<vmem>>, vector<4x16x16xf32>,
    %c0_24 = arith.constant 0 : index
    %c0_25 = arith.constant 0 : index
    %c0_26 = arith.constant 0 : index
    %14 = vector.load %arg3[%c0_24, %c0_25, %c0_26] : memref<4x5x5xf32, #tpu.memory_space<vmem>>, vector<4x5x5xf32>
    %c0_27 = arith.constant 0 : index
    %c0_28 = arith.constant 0 : index
    %c0_29 = arith.constant 0 : index
    %15 = vector.load %arg4[%c0_27, %c0_28, %c0_29] : memref<4x1x1xf32, #tpu.memory_space<vmem>>, vector<4x1x1xf32>
    %16 = vector.extract_strided_slice %14 {offsets = [0, 0, 0], sizes = [4, 1, 1], strides = [1, 1, 1]} : vector<4x5x5xf32> to vector<4x1x1xf32>
    %17 = vector.shape_cast %16 : vector<4x1x1xf32> to vector<4xf32>
    %18 = vector.shape_cast %17 : vector<4xf32> to vector<4x1x1xf32>
    %19 = vector.extract_strided_slice %14 {offsets = [0, 0, 1], sizes = [4, 1, 1], strides = [1, 1, 1]} : vector<4x5x5xf32> to vector<4x1x1xf32>
    %20 = vector.shape_cast %19 : vector<4x1x1xf32> to vector<4xf32>
    %21 = vector.shape_cast %20 : vector<4xf32> to vector<4x1x1xf32>
    %22 = vector.extract_strided_slice %14 {offsets = [0, 0, 2], sizes = [4, 1, 1], strides = [1, 1, 1]} : vector<4x5x5xf32> to vector<4x1x1xf32>
    %23 = vector.shape_cast %22 : vector<4x1x1xf32> to vector<4xf32>
    %24 = vector.shape_cast %23 : vector<4xf32> to vector<4x1x1xf32>
    %25 = vector.extract_strided_slice %14 {offsets = [0, 0, 3], sizes = [4, 1, 1], strides = [1, 1, 1]} : vector<4x5x5xf32> to vector<4x1x1xf32>
    %26 = vector.shape_cast %25 : vector<4x1x1xf32> to vector<4xf32>
    %27 = vector.shape_cast %26 : vector<4xf32> to vector<4x1x1xf32>
    %28 = vector.extract_strided_slice %14 {offsets = [0, 0, 4], sizes = [4, 1, 1], strides = [1, 1, 1]} : vector<4x5x5xf32> to vector<4x1x1xf32>
    %29 = vector.shape_cast %28 : vector<4x1x1xf32> to vector<4xf32>
    %30 = vector.shape_cast %29 : vector<4xf32> to vector<4x1x1xf32>
    %31 = vector.extract_strided_slice %14 {offsets = [0, 1, 0], sizes = [4, 1, 1], strides = [1, 1, 1]} : vector<4x5x5xf32> to vector<4x1x1xf32>
    %32 = vector.shape_cast %31 : vector<4x1x1xf32> to vector<4xf32>
    %33 = vector.shape_cast %32 : vector<4xf32> to vector<4x1x1xf32>
    %34 = vector.extract_strided_slice %14 {offsets = [0, 1, 1], sizes = [4, 1, 1], strides = [1, 1, 1]} : vector<4x5x5xf32> to vector<4x1x1xf32>
    %35 = vector.shape_cast %34 : vector<4x1x1xf32> to vector<4xf32>
    %36 = vector.shape_cast %35 : vector<4xf32> to vector<4x1x1xf32>
    %37 = vector.extract_strided_slice %14 {offsets = [0, 1, 2], sizes = [4, 1, 1], strides = [1, 1, 1]} : vector<4x5x5xf32> to vector<4x1x1xf32>
    %38 = vector.shape_cast %37 : vector<4x1x1xf32> to vector<4xf32>
    %39 = vector.shape_cast %38 : vector<4xf32> to vector<4x1x1xf32>
    %40 = vector.extract_strided_slice %14 {offsets = [0, 1, 3], sizes = [4, 1, 1], strides = [1, 1, 1]} : vector<4x5x5xf32> to vector<4x1x1xf32>
    %41 = vector.shape_cast %40 : vector<4x1x1xf32> to vector<4xf32>
    %42 = vector.shape_cast %41 : vector<4xf32> to vector<4x1x1xf32>
    %43 = vector.extract_strided_slice %14 {offsets = [0, 1, 4], sizes = [4, 1, 1], strides = [1, 1, 1]} : vector<4x5x5xf32> to vector<4x1x1xf32>
    %44 = vector.shape_cast %43 : vector<4x1x1xf32> to vector<4xf32>
    %45 = vector.shape_cast %44 : vector<4xf32> to vector<4x1x1xf32>
    %46 = vector.extract_strided_slice %14 {offsets = [0, 2, 0], sizes = [4, 1, 1], strides = [1, 1, 1]} : vector<4x5x5xf32> to vector<4x1x1xf32>
    %47 = vector.shape_cast %46 : vector<4x1x1xf32> to vector<4xf32>
    %48 = vector.shape_cast %47 : vector<4xf32> to vector<4x1x1xf32>
    %49 = vector.extract_strided_slice %14 {offsets = [0, 2, 1], sizes = [4, 1, 1], strides = [1, 1, 1]} : vector<4x5x5xf32> to vector<4x1x1xf32>
    %50 = vector.shape_cast %49 : vector<4x1x1xf32> to vector<4xf32>
    %51 = vector.shape_cast %50 : vector<4xf32> to vector<4x1x1xf32>
    %52 = vector.extract_strided_slice %14 {offsets = [0, 2, 2], sizes = [4, 1, 1], strides = [1, 1, 1]} : vector<4x5x5xf32> to vector<4x1x1xf32>
    %53 = vector.shape_cast %52 : vector<4x1x1xf32> to vector<4xf32>
    %54 = vector.shape_cast %53 : vector<4xf32> to vector<4x1x1xf32>
    %55 = vector.extract_strided_slice %14 {offsets = [0, 2, 3], sizes = [4, 1, 1], strides = [1, 1, 1]} : vector<4x5x5xf32> to vector<4x1x1xf32>
    %56 = vector.shape_cast %55 : vector<4x1x1xf32> to vector<4xf32>
    %57 = vector.shape_cast %56 : vector<4xf32> to vector<4x1x1xf32>
    %58 = vector.extract_strided_slice %14 {offsets = [0, 2, 4], sizes = [4, 1, 1], strides = [1, 1, 1]} : vector<4x5x5xf32> to vector<4x1x1xf32>
    %59 = vector.shape_cast %58 : vector<4x1x1xf32> to vector<4xf32>
    %60 = vector.shape_cast %59 : vector<4xf32> to vector<4x1x1xf32>
    %61 = vector.extract_strided_slice %14 {offsets = [0, 3, 0], sizes = [4, 1, 1], strides = [1, 1, 1]} : vector<4x5x5xf32> to vector<4x1x1xf32>
    %62 = vector.shape_cast %61 : vector<4x1x1xf32> to vector<4xf32>
    %63 = vector.shape_cast %62 : vector<4xf32> to vector<4x1x1xf32>
    %64 = vector.extract_strided_slice %14 {offsets = [0, 3, 1], sizes = [4, 1, 1], strides = [1, 1, 1]} : vector<4x5x5xf32> to vector<4x1x1xf32>
    %65 = vector.shape_cast %64 : vector<4x1x1xf32> to vector<4xf32>
    %66 = vector.shape_cast %65 : vector<4xf32> to vector<4x1x1xf32>
    %67 = vector.extract_strided_slice %14 {offsets = [0, 3, 2], sizes = [4, 1, 1], strides = [1, 1, 1]} : vector<4x5x5xf32> to vector<4x1x1xf32>
    %68 = vector.shape_cast %67 : vector<4x1x1xf32> to vector<4xf32>
    %69 = vector.shape_cast %68 : vector<4xf32> to vector<4x1x1xf32>
    %70 = vector.extract_strided_slice %14 {offsets = [0, 3, 3], sizes = [4, 1, 1], strides = [1, 1, 1]} : vector<4x5x5xf32> to vector<4x1x1xf32>
    %71 = vector.shape_cast %70 : vector<4x1x1xf32> to vector<4xf32>
    %72 = vector.shape_cast %71 : vector<4xf32> to vector<4x1x1xf32>
    %73 = vector.extract_strided_slice %14 {offsets = [0, 3, 4], sizes = [4, 1, 1], strides = [1, 1, 1]} : vector<4x5x5xf32> to vector<4x1x1xf32>
    %74 = vector.shape_cast %73 : vector<4x1x1xf32> to vector<4xf32>
    %75 = vector.shape_cast %74 : vector<4xf32> to vector<4x1x1xf32>
    %76 = vector.extract_strided_slice %14 {offsets = [0, 4, 0], sizes = [4, 1, 1], strides = [1, 1, 1]} : vector<4x5x5xf32> to vector<4x1x1xf32>
    %77 = vector.shape_cast %76 : vector<4x1x1xf32> to vector<4xf32>
    %78 = vector.shape_cast %77 : vector<4xf32> to vector<4x1x1xf32>
    %79 = vector.extract_strided_slice %14 {offsets = [0, 4, 1], sizes = [4, 1, 1], strides = [1, 1, 1]} : vector<4x5x5xf32> to vector<4x1x1xf32>
    %80 = vector.shape_cast %79 : vector<4x1x1xf32> to vector<4xf32>
    %81 = vector.shape_cast %80 : vector<4xf32> to vector<4x1x1xf32>
    %82 = vector.extract_strided_slice %14 {offsets = [0, 4, 2], sizes = [4, 1, 1], strides = [1, 1, 1]} : vector<4x5x5xf32> to vector<4x1x1xf32>
    %83 = vector.shape_cast %82 : vector<4x1x1xf32> to vector<4xf32>
    %84 = vector.shape_cast %83 : vector<4xf32> to vector<4x1x1xf32>
    %85 = vector.extract_strided_slice %14 {offsets = [0, 4, 3], sizes = [4, 1, 1], strides = [1, 1, 1]} : vector<4x5x5xf32> to vector<4x1x1xf32>
    %86 = vector.shape_cast %85 : vector<4x1x1xf32> to vector<4xf32>
    %87 = vector.shape_cast %86 : vector<4xf32> to vector<4x1x1xf32>
    %88 = vector.extract_strided_slice %14 {offsets = [0, 4, 4], sizes = [4, 1, 1], strides = [1, 1, 1]} : vector<4x5x5xf32> to vector<4x1x1xf32>
    %89 = vector.shape_cast %88 : vector<4x1x1xf32> to vector<4xf32>
    %90 = vector.shape_cast %89 : vector<4xf32> to vector<4x1x1xf32>
    %c0_i32 = arith.constant 0 : i32
    %c16_i32 = arith.constant 16 : i32
    %91 = arith.muli %c0_i32, %c16_i32 : i32
    %92 = tpu.assume_multiple %91, 16 : i32
    %cst_30 = arith.constant 0.000000e+00 : f32
    %93 = vector.broadcast %cst_30 : f32 to vector<4x16x16xf32>
    %c0_i32_31 = arith.constant 0 : i32
    %94 = arith.addi %92, %c0_i32_31 : i32
    %c0_32 = arith.constant 0 : index
    %95 = arith.index_cast %94 : i32 to index
    %c0_33 = arith.constant 0 : index
    %96 = vector.load %arg6[%c0_32, %95, %c0_33] : memref<4x24x128xf32, #tpu.memory_space<vmem>>, vector<4x16x128xf32>
    %97 = vector.extract_strided_slice %96 {offsets = [0, 0, 0], sizes = [4, 16, 16], strides = [1, 1, 1]} : vector<4x16x128xf32> to vector<4x16x16xf32>
    %98 = vector.broadcast %18 : vector<4x1x1xf32> to vector<4x16x16xf32>
    %99 = arith.mulf %97, %98 : vector<4x16x16xf32>
    %100 = arith.addf %93, %99 : vector<4x16x16xf32>
    %101 = vector.extract_strided_slice %96 {offsets = [0, 0, 1], sizes = [4, 16, 16], strides = [1, 1, 1]} : vector<4x16x128xf32> to vector<4x16x16xf32>
    %102 = vector.broadcast %21 : vector<4x1x1xf32> to vector<4x16x16xf32>
    %103 = arith.mulf %101, %102 : vector<4x16x16xf32>
    %104 = arith.addf %100, %103 : vector<4x16x16xf32>
    %105 = vector.extract_strided_slice %96 {offsets = [0, 0, 2], sizes = [4, 16, 16], strides = [1, 1, 1]} : vector<4x16x128xf32> to vector<4x16x16xf32>
    %106 = vector.broadcast %24 : vector<4x1x1xf32> to vector<4x16x16xf32>
    %107 = arith.mulf %105, %106 : vector<4x16x16xf32>
    %108 = arith.addf %104, %107 : vector<4x16x16xf32>
    %109 = vector.extract_strided_slice %96 {offsets = [0, 0, 3], sizes = [4, 16, 16], strides = [1, 1, 1]} : vector<4x16x128xf32> to vector<4x16x16xf32>
    %110 = vector.broadcast %27 : vector<4x1x1xf32> to vector<4x16x16xf32>
    %111 = arith.mulf %109, %110 : vector<4x16x16xf32>
    %112 = arith.addf %108, %111 : vector<4x16x16xf32>
    %113 = vector.extract_strided_slice %96 {offsets = [0, 0, 4], sizes = [4, 16, 16], strides = [1, 1, 1]} : vector<4x16x128xf32> to vector<4x16x16xf32>
    %114 = vector.broadcast %30 : vector<4x1x1xf32> to vector<4x16x16xf32>
    %115 = arith.mulf %113, %114 : vector<4x16x16xf32>
    %116 = arith.addf %112, %115 : vector<4x16x16xf32>
    %c1_i32 = arith.constant 1 : i32
    %117 = arith.addi %92, %c1_i32 : i32
    %c0_34 = arith.constant 0 : index
    %118 = arith.index_cast %117 : i32 to index
    %c0_35 = arith.constant 0 : index
    %119 = vector.load %arg6[%c0_34, %118, %c0_35] : memref<4x24x128xf32, #tpu.memory_space<vmem>>, vector<4x16x128xf32>
    %120 = vector.extract_strided_slice %119 {offsets = [0, 0, 0], sizes = [4, 16, 16], strides = [1, 1, 1]} : vector<4x16x128xf32> to vector<4x16x16xf32>
    %121 = vector.broadcast %33 : vector<4x1x1xf32> to vector<4x16x16xf32>
    %122 = arith.mulf %120, %121 : vector<4x16x16xf32>
    %123 = arith.addf %116, %122 : vector<4x16x16xf32>
    %124 = vector.extract_strided_slice %119 {offsets = [0, 0, 1], sizes = [4, 16, 16], strides = [1, 1, 1]} : vector<4x16x128xf32> to vector<4x16x16xf32>
    %125 = vector.broadcast %36 : vector<4x1x1xf32> to vector<4x16x16xf32>
    %126 = arith.mulf %124, %125 : vector<4x16x16xf32>
    %127 = arith.addf %123, %126 : vector<4x16x16xf32>
    %128 = vector.extract_strided_slice %119 {offsets = [0, 0, 2], sizes = [4, 16, 16], strides = [1, 1, 1]} : vector<4x16x128xf32> to vector<4x16x16xf32>
    %129 = vector.broadcast %39 : vector<4x1x1xf32> to vector<4x16x16xf32>
    %130 = arith.mulf %128, %129 : vector<4x16x16xf32>
    %131 = arith.addf %127, %130 : vector<4x16x16xf32>
    %132 = vector.extract_strided_slice %119 {offsets = [0, 0, 3], sizes = [4, 16, 16], strides = [1, 1, 1]} : vector<4x16x128xf32> to vector<4x16x16xf32>
    %133 = vector.broadcast %42 : vector<4x1x1xf32> to vector<4x16x16xf32>
    %134 = arith.mulf %132, %133 : vector<4x16x16xf32>
    %135 = arith.addf %131, %134 : vector<4x16x16xf32>
    %136 = vector.extract_strided_slice %119 {offsets = [0, 0, 4], sizes = [4, 16, 16], strides = [1, 1, 1]} : vector<4x16x128xf32> to vector<4x16x16xf32>
    %137 = vector.broadcast %45 : vector<4x1x1xf32> to vector<4x16x16xf32>
    %138 = arith.mulf %136, %137 : vector<4x16x16xf32>
    %139 = arith.addf %135, %138 : vector<4x16x16xf32>
    %c2_i32 = arith.constant 2 : i32
    %140 = arith.addi %92, %c2_i32 : i32
    %c0_36 = arith.constant 0 : index
    %141 = arith.index_cast %140 : i32 to index
    %c0_37 = arith.constant 0 : index
    %142 = vector.load %arg6[%c0_36, %141, %c0_37] : memref<4x24x128xf32, #tpu.memory_space<vmem>>, vector<4x16x128xf32>
    %143 = vector.extract_strided_slice %142 {offsets = [0, 0, 0], sizes = [4, 16, 16], strides = [1, 1, 1]} : vector<4x16x128xf32> to vector<4x16x16xf32>
    %144 = vector.broadcast %48 : vector<4x1x1xf32> to vector<4x16x16xf32>
    %145 = arith.mulf %143, %144 : vector<4x16x16xf32>
    %146 = arith.addf %139, %145 : vector<4x16x16xf32>
    %147 = vector.extract_strided_slice %142 {offsets = [0, 0, 1], sizes = [4, 16, 16], strides = [1, 1, 1]} : vector<4x16x128xf32> to vector<4x16x16xf32>
    %148 = vector.broadcast %51 : vector<4x1x1xf32> to vector<4x16x16xf32>
    %149 = arith.mulf %147, %148 : vector<4x16x16xf32>
    %150 = arith.addf %146, %149 : vector<4x16x16xf32>
    %151 = vector.extract_strided_slice %142 {offsets = [0, 0, 2], sizes = [4, 16, 16], strides = [1, 1, 1]} : vector<4x16x128xf32> to vector<4x16x16xf32>
    %152 = vector.broadcast %54 : vector<4x1x1xf32> to vector<4x16x16xf32>
    %153 = arith.mulf %151, %152 : vector<4x16x16xf32>
    %154 = arith.addf %150, %153 : vector<4x16x16xf32>
    %155 = vector.extract_strided_slice %142 {offsets = [0, 0, 3], sizes = [4, 16, 16], strides = [1, 1, 1]} : vector<4x16x128xf32> to vector<4x16x16xf32>
    %156 = vector.broadcast %57 : vector<4x1x1xf32> to vector<4x16x16xf32>
    %157 = arith.mulf %155, %156 : vector<4x16x16xf32>
    %158 = arith.addf %154, %157 : vector<4x16x16xf32>
    %159 = vector.extract_strided_slice %142 {offsets = [0, 0, 4], sizes = [4, 16, 16], strides = [1, 1, 1]} : vector<4x16x128xf32> to vector<4x16x16xf32>
    %160 = vector.broadcast %60 : vector<4x1x1xf32> to vector<4x16x16xf32>
    %161 = arith.mulf %159, %160 : vector<4x16x16xf32>
    %162 = arith.addf %158, %161 : vector<4x16x16xf32>
    %c3_i32 = arith.constant 3 : i32
    %163 = arith.addi %92, %c3_i32 : i32
    %c0_38 = arith.constant 0 : index
    %164 = arith.index_cast %163 : i32 to index
    %c0_39 = arith.constant 0 : index
    %165 = vector.load %arg6[%c0_38, %164, %c0_39] : memref<4x24x128xf32, #tpu.memory_space<vmem>>, vector<4x16x128xf32>
    %166 = vector.extract_strided_slice %165 {offsets = [0, 0, 0], sizes = [4, 16, 16], strides = [1, 1, 1]} : vector<4x16x128xf32> to vector<4x16x16xf32>
    %167 = vector.broadcast %63 : vector<4x1x1xf32> to vector<4x16x16xf32>
    %168 = arith.mulf %166, %167 : vector<4x16x16xf32>
    %169 = arith.addf %162, %168 : vector<4x16x16xf32>
    %170 = vector.extract_strided_slice %165 {offsets = [0, 0, 1], sizes = [4, 16, 16], strides = [1, 1, 1]} : vector<4x16x128xf32> to vector<4x16x16xf32>
    %171 = vector.broadcast %66 : vector<4x1x1xf32> to vector<4x16x16xf32>
    %172 = arith.mulf %170, %171 : vector<4x16x16xf32>
    %173 = arith.addf %169, %172 : vector<4x16x16xf32>
    %174 = vector.extract_strided_slice %165 {offsets = [0, 0, 2], sizes = [4, 16, 16], strides = [1, 1, 1]} : vector<4x16x128xf32> to vector<4x16x16xf32>
    %175 = vector.broadcast %69 : vector<4x1x1xf32> to vector<4x16x16xf32>
    %176 = arith.mulf %174, %175 : vector<4x16x16xf32>
    %177 = arith.addf %173, %176 : vector<4x16x16xf32>
    %178 = vector.extract_strided_slice %165 {offsets = [0, 0, 3], sizes = [4, 16, 16], strides = [1, 1, 1]} : vector<4x16x128xf32> to vector<4x16x16xf32>
    %179 = vector.broadcast %72 : vector<4x1x1xf32> to vector<4x16x16xf32>
    %180 = arith.mulf %178, %179 : vector<4x16x16xf32>
    %181 = arith.addf %177, %180 : vector<4x16x16xf32>
    %182 = vector.extract_strided_slice %165 {offsets = [0, 0, 4], sizes = [4, 16, 16], strides = [1, 1, 1]} : vector<4x16x128xf32> to vector<4x16x16xf32>
    %183 = vector.broadcast %75 : vector<4x1x1xf32> to vector<4x16x16xf32>
    %184 = arith.mulf %182, %183 : vector<4x16x16xf32>
    %185 = arith.addf %181, %184 : vector<4x16x16xf32>
    %c4_i32 = arith.constant 4 : i32
    %186 = arith.addi %92, %c4_i32 : i32
    %c0_40 = arith.constant 0 : index
    %187 = arith.index_cast %186 : i32 to index
    %c0_41 = arith.constant 0 : index
    %188 = vector.load %arg6[%c0_40, %187, %c0_41] : memref<4x24x128xf32, #tpu.memory_space<vmem>>, vector<4x16x128xf32>
    %189 = vector.extract_strided_slice %188 {offsets = [0, 0, 0], sizes = [4, 16, 16], strides = [1, 1, 1]} : vector<4x16x128xf32> to vector<4x16x16xf32>
    %190 = vector.broadcast %78 : vector<4x1x1xf32> to vector<4x16x16xf32>
    %191 = arith.mulf %189, %190 : vector<4x16x16xf32>
    %192 = arith.addf %185, %191 : vector<4x16x16xf32>
    %193 = vector.extract_strided_slice %188 {offsets = [0, 0, 1], sizes = [4, 16, 16], strides = [1, 1, 1]} : vector<4x16x128xf32> to vector<4x16x16xf32>
    %194 = vector.broadcast %81 : vector<4x1x1xf32> to vector<4x16x16xf32>
    %195 = arith.mulf %193, %194 : vector<4x16x16xf32>
    %196 = arith.addf %192, %195 : vector<4x16x16xf32>
    %197 = vector.extract_strided_slice %188 {offsets = [0, 0, 2], sizes = [4, 16, 16], strides = [1, 1, 1]} : vector<4x16x128xf32> to vector<4x16x16xf32>
    %198 = vector.broadcast %84 : vector<4x1x1xf32> to vector<4x16x16xf32>
    %199 = arith.mulf %197, %198 : vector<4x16x16xf32>
    %200 = arith.addf %196, %199 : vector<4x16x16xf32>
    %201 = vector.extract_strided_slice %188 {offsets = [0, 0, 3], sizes = [4, 16, 16], strides = [1, 1, 1]} : vector<4x16x128xf32> to vector<4x16x16xf32>
    %202 = vector.broadcast %87 : vector<4x1x1xf32> to vector<4x16x16xf32>
    %203 = arith.mulf %201, %202 : vector<4x16x16xf32>
    %204 = arith.addf %200, %203 : vector<4x16x16xf32>
    %205 = vector.extract_strided_slice %188 {offsets = [0, 0, 4], sizes = [4, 16, 16], strides = [1, 1, 1]} : vector<4x16x128xf32> to vector<4x16x16xf32>
    %206 = vector.broadcast %90 : vector<4x1x1xf32> to vector<4x16x16xf32>
    %207 = arith.mulf %205, %206 : vector<4x16x16xf32>
    %208 = arith.addf %204, %207 : vector<4x16x16xf32>
    %209 = vector.broadcast %15 : vector<4x1x1xf32> to vector<4x16x16xf32>
    %210 = arith.addf %208, %209 : vector<4x16x16xf32>
    %211 = arith.negf %210 : vector<4x16x16xf32>
    %212 = math.exp %211 : vector<4x16x16xf32>
    %cst_42 = arith.constant 1.000000e+00 : f32
    %213 = vector.broadcast %cst_42 : f32 to vector<4x16x16xf32>
    %214 = arith.addf %213, %212 : vector<4x16x16xf32>
    %215 = arith.divf %213, %214 : vector<4x16x16xf32>
    %216 = arith.mulf %210, %215 : vector<4x16x16xf32>
    %c0_43 = arith.constant 0 : index
    %c1 = arith.constant 1 : index
    %c0_44 = arith.constant 0 : index
    %217 = arith.index_cast %92 : i32 to index
    %c0_45 = arith.constant 0 : index
    %218 = vector.load %arg5[%c0_43, %c1, %c0_44, %217, %c0_45] : memref<1x2x4x16x16xf32, #tpu.memory_space<vmem>>, vector<1x1x4x16x16xf32>
    %219 = vector.shape_cast %218 : vector<1x1x4x16x16xf32> to vector<4x16x16xf32>
    %220 = vector.shape_cast %216 : vector<4x16x16xf32> to vector<1x1x4x16x16xf32>
    tpu.vector_store %arg5[%c0_43, %c1, %c0_44, %217, %c0_45], %220 {strides = array<i32>} : memref<1x2x4x16x16xf32, #tpu.memory_space<vmem>>, vector<1x1x4x16x16xf32>,
    %c1_i32_46 = arith.constant 1 : i32
    return
  }
  func.func @transform_0(%arg0: i32, %arg1: i32) -> (i32, i32, i32, i32) {
    %c0_i32 = arith.constant 0 : i32
    %c0_i32_0 = arith.constant 0 : i32
    %c0_i32_1 = arith.constant 0 : i32
    return %arg0, %arg1, %c0_i32, %c0_i32_0 : i32, i32, i32, i32
  }
  func.func @transform_1(%arg0: i32, %arg1: i32) -> (i32, i32, i32) {
    %c0_i32 = arith.constant 0 : i32
    %c0_i32_0 = arith.constant 0 : i32
    %c0_i32_1 = arith.constant 0 : i32
    return %arg1, %c0_i32, %c0_i32_0 : i32, i32, i32
  }
  func.func @transform_2(%arg0: i32, %arg1: i32) -> (i32, i32, i32) {
    %c0_i32 = arith.constant 0 : i32
    %c0_i32_0 = arith.constant 0 : i32
    %c0_i32_1 = arith.constant 0 : i32
    return %arg1, %c0_i32, %c0_i32_0 : i32, i32, i32
  }
  func.func @transform_3(%arg0: i32, %arg1: i32) -> (i32, i32, i32, i32, i32) {
    %c0_i32 = arith.constant 0 : i32
    %c0_i32_0 = arith.constant 0 : i32
    %c0_i32_1 = arith.constant 0 : i32
    %c0_i32_2 = arith.constant 0 : i32
    return %arg0, %c0_i32, %arg1, %c0_i32_0, %c0_i32_1 : i32, i32, i32, i32, i32
  }
}

</mosaic_0001>

<llo_original>
// kernel: _ghost_conv_forward.2
$region0: #{_ghost_conv_forward.2}
  #allocation0 [shape = 'u32[]', space=smem, size = 0x4, offset = 0x4, fixed_abs, tag = 'smem constant byte address 0x4 - core index']
  #allocation1 [shape = 'u32[144,128]{1,0:T(1,128)}', space=vmem, size = 0x12000, scoped, tag = 'internal scratch']
  %s0 = inlined_call_operand.vmem [shape: f32[2,4,256], index: 0, kind: input, shape index: {}]
  %s1 = inlined_call_operand.vmem [shape: f32[4,4], index: 1, kind: input, shape index: {}]
  %s2 = inlined_call_operand.vmem [shape: f32[4,1], index: 2, kind: input, shape index: {}]
  %s3 = inlined_call_operand.vmem [shape: f32[2,4,256], index: 3, kind: output, shape index: {}]
  %s4 = sld [smem:[#allocation0]]
  $region45: #{_ghost_conv_forward.2} parent=0
    _
  %s6 = ssub.s32 1, %s4
  %s7 = scalar_select 0, %s6, %s4
  loop: start=0, step=1, limit=4
  $region2: #{_ghost_conv_forward.2} parent=0 // loop_pre_header
    _
  $region3: #{_ghost_conv_forward.2} parent=0 // loop_header
    %s9 = sphi 0, %s13
    %p10 = scmp.ge.s32.totalorder %s9, 4
    %s16 = sphi 0, %s28
    %s17 = sphi 0, %s24
    %s18 = sphi 0, %s16
    %s19 = sphi 0, %s17
    %s20 = sphi 0, %s18
    %s21 = sphi 0, %s19
    %s33 = sphi 0, %s35
    %s36 = sphi 0, %s33
    %s37 = sphi 0, %s36
    %s53 = sphi 0, %s37
    %s57 = sphi 0, %s57
    %s59 = sphi 0, %s57
    %s60 = sphi 0, %s59
    %s74 = sphi 0, %s60
    %s78 = sphi 0, %s78
    %s80 = sphi 0, %s78
    %s81 = sphi 0, %s80
    %s95 = sphi 0, %s81
    %s103 = sphi 0, %s105
    %s106 = sphi 0, %s103
    %s107 = sphi 0, %s106
    %s123 = sphi 0, %s107
  $region4: #{_ghost_conv_forward.2} parent=0 // loop_header_branch
    %12 = sbr.rel (%p10) target = $region8
  $region5: #{_ghost_conv_forward.2} parent=0 // loop_body
    %s14 = ssub.s32 %s9, 1
    %s15 = ssub.s32 %s9, 2
    %s22 = sadd.s32 1, %s17
    %p23 = scmp.ge.s32.totalorder %s22, 1
    %s24 = scalar_select %p23, 0, %s22
    %s25 = sadd.s32 1, %s16
    %s26 = scalar_select %p23, %s25, %s16
    %p27 = scmp.ge.s32.totalorder %s26, 2
    %s28 = scalar_select %p27, 0, %s26
    %s29 = ssub.s32 %s16, %s28
    %s30 = ssub.s32 %s17, %s24
    %s31 = sor.u32 %s29, %s30
    %p32 = scmp.eq.s32.totalorder %s31, 0
    %s34 = sadd.s32 %s33, 1
    %s35 = scalar_select %p32, %s33, %s34
    %p38 = pneg %p32
    %p39 = scmp.eq.s32.totalorder %s9, 1
    %p40 = por %p38, %p39
    %p41 = scmp.ne.s32.totalorder %s33, %s36
    %p42 = scmp.eq.s32.totalorder %s9, 0
    %p43 = por %p41, %p42
    %p44 = scmp.ne.s32.totalorder %s33, %s36
    %p45 = scmp.eq.s32.totalorder %s14, 1
    %p46 = por %p44, %p45
    %p47 = scmp.ne.s32.totalorder %s36, %s37
    %p48 = scmp.eq.s32.totalorder %s14, 0
    %p49 = por %p47, %p48
    %p50 = scmp.ne.s32.totalorder %s36, %s37
    %p51 = scmp.eq.s32.totalorder %s15, 1
    %p52 = por %p50, %p51
    %p54 = scmp.ne.s32.totalorder %s37, %s53
    %p55 = scmp.eq.s32.totalorder %s15, 0
    %p56 = por %p54, %p55
    %s58 = sadd.s32 %s57, 1
    %p61 = scmp.eq.s32.totalorder %s9, 1
    %p62 = scmp.ne.s32.totalorder %s57, %s59
    %p63 = scmp.eq.s32.totalorder %s9, 0
    %p64 = por %p62, %p63
    %p65 = scmp.ne.s32.totalorder %s57, %s59
    %p66 = scmp.eq.s32.totalorder %s14, 1
    %p67 = por %p65, %p66
    %p68 = scmp.ne.s32.totalorder %s59, %s60
    %p69 = scmp.eq.s32.totalorder %s14, 0
    %p70 = por %p68, %p69
    %p71 = scmp.ne.s32.totalorder %s59, %s60
    %p72 = scmp.eq.s32.totalorder %s15, 1
    %p73 = por %p71, %p72
    %p75 = scmp.ne.s32.totalorder %s60, %s74
    %p76 = scmp.eq.s32.totalorder %s15, 0
    %p77 = por %p75, %p76
    %s79 = sadd.s32 %s78, 1
    %p82 = scmp.eq.s32.totalorder %s9, 1
    %p83 = scmp.ne.s32.totalorder %s78, %s80
    %p84 = scmp.eq.s32.totalorder %s9, 0
    %p85 = por %p83, %p84
    %p86 = scmp.ne.s32.totalorder %s78, %s80
    %p87 = scmp.eq.s32.totalorder %s14, 1
    %p88 = por %p86, %p87
    %p89 = scmp.ne.s32.totalorder %s80, %s81
    %p90 = scmp.eq.s32.totalorder %s14, 0
    %p91 = por %p89, %p90
    %p92 = scmp.ne.s32.totalorder %s80, %s81
    %p93 = scmp.eq.s32.totalorder %s15, 1
    %p94 = por %p92, %p93
    %p96 = scmp.ne.s32.totalorder %s81, %s95
    %p97 = scmp.eq.s32.totalorder %s15, 0
    %p98 = por %p96, %p97
    %s99 = ssub.s32 %s16, %s28
    %s100 = ssub.s32 %s17, %s24
    %s101 = sor.u32 %s99, %s100
    %p102 = scmp.eq.s32.totalorder %s101, 0
    %s104 = sadd.s32 %s103, 1
    %s105 = scalar_select %p102, %s103, %s104
    %p108 = pneg %p102
    %p109 = scmp.eq.s32.totalorder %s9, 1
    %p110 = por %p108, %p109
    %p111 = scmp.ne.s32.totalorder %s103, %s106
    %p112 = scmp.eq.s32.totalorder %s9, 0
    %p113 = por %p111, %p112
    %p114 = scmp.ne.s32.totalorder %s103, %s106
    %p115 = scmp.eq.s32.totalorder %s14, 1
    %p116 = por %p114, %p115
    %p117 = scmp.ne.s32.totalorder %s106, %s107
    %p118 = scmp.eq.s32.totalorder %s14, 0
    %p119 = por %p117, %p118
    %p120 = scmp.ne.s32.totalorder %s106, %s107
    %p121 = scmp.eq.s32.totalorder %s15, 1
    %p122 = por %p120, %p121
    %p124 = scmp.ne.s32.totalorder %s107, %s123
    %p125 = scmp.eq.s32.totalorder %s15, 0
    %p126 = por %p124, %p125
    %p127 = scmp.le.s32.totalorder 1, %s9
    %p128 = scmp.lt.s32.totalorder %s9, 3
    %p129 = pnand %p127, %p128
    %p130 = pneg %p129
    // Predicated region
    $region9: #{_ghost_conv_forward.2} parent=5 // pred_check
      _
    $region10: #{_ghost_conv_forward.2} parent=5 // pred_check_branch
      %132 = sbr.rel (%p129) target = $region12
    $region11: #{_ghost_conv_forward.2} parent=5 // pred_region
      %s133 = ssub.s32 %s9, 1
      // Predicated region
      $region13: #{_ghost_conv_forward.2} parent=11 // pred_check
        %p134 = pneg %p70
      $region14: #{_ghost_conv_forward.2} parent=11 // pred_check_branch
        %136 = sbr.rel (%p134) target = $region16
      $region15: #{_ghost_conv_forward.2} parent=11 // pred_region
        _
      $region16: #{_ghost_conv_forward.2} parent=11 // pred_fallthru
        _
      // Predicated region
      $region17: #{_ghost_conv_forward.2} parent=11 // pred_check
        %p137 = pneg %p91
      $region18: #{_ghost_conv_forward.2} parent=11 // pred_check_branch
        %139 = sbr.rel (%p137) target = $region20
      $region19: #{_ghost_conv_forward.2} parent=11 // pred_region
        _
      $region20: #{_ghost_conv_forward.2} parent=11 // pred_fallthru
        _
    $region12: #{_ghost_conv_forward.2} parent=5 // pred_fallthru
      _
    %p140 = scmp.lt.s32.totalorder %s9, 2
    // Predicated region
    $region21: #{_ghost_conv_forward.2} parent=5 // pred_check
      %p141 = pneg %p140
    $region22: #{_ghost_conv_forward.2} parent=5 // pred_check_branch
      %143 = sbr.rel (%p141) target = $region24
    $region23: #{_ghost_conv_forward.2} parent=5 // pred_region
      // Predicated region
      $region25: #{_ghost_conv_forward.2} parent=23 // pred_check
        %p144 = pneg %p43
      $region26: #{_ghost_conv_forward.2} parent=23 // pred_check_branch
        %146 = sbr.rel (%p144) target = $region28
      $region27: #{_ghost_conv_forward.2} parent=23 // pred_region
        %s147 = smul.u32 2, %s17
        %p148 = scmp.lt.s32.totalorder %s16, 1
        %s149 = scalar_select %p148, %s16, 1
        %p150 = scmp.lt.s32.totalorder %s147, 1
        %s151 = scalar_select %p150, %s147, 1
        %s152 = smul.addr %s149, 2
        %s153 = sadd.s32 %s151, %s152
        %s154 = smul.addr %s153, 4
        %s155 = scalar_lea.vmem %s0, %s154
        %s156 = smul.u32 2, %s17
      $region28: #{_ghost_conv_forward.2} parent=23 // pred_fallthru
        _
    $region24: #{_ghost_conv_forward.2} parent=5 // pred_fallthru
      _
    %p157 = scmp.le.s32.totalorder 1, %s9
    %p158 = scmp.lt.s32.totalorder %s9, 3
    %p159 = pnand %p157, %p158
    %p160 = pneg %p159
    // Predicated region
    $region29: #{_ghost_conv_forward.2} parent=5 // pred_check
      _
    $region30: #{_ghost_conv_forward.2} parent=5 // pred_check_branch
      %162 = sbr.rel (%p159) target = $region32
    $region31: #{_ghost_conv_forward.2} parent=5 // pred_region
      %s163 = ssub.s32 %s9, 1
      %s164 = smul.u32 2, %s19
      %p165 = scmp.lt.s32.totalorder %s18, 1
      %s166 = scalar_select %p165, %s18, 1
      %p167 = scmp.lt.s32.totalorder %s164, 1
      %s168 = scalar_select %p167, %s164, 1
      %s169 = smul.addr %s166, 2
      %s170 = sadd.s32 %s168, %s169
      %s171 = smul.addr %s170, 4
      %s172 = scalar_lea.vmem %s0, %s171
      %p173 = pneg %p49
      %p174 = pneg %p46
      %p175 = pneg %p70
      %p176 = pneg %p67
      %p177 = pneg %p91
      %p178 = pneg %p88
      %p179 = pneg %p119
      %p180 = pneg %p116
      %s181 = smul.u32 2, %s19
      %p182 = scmp.lt.s32.totalorder %s18, 1
      %s183 = scalar_select %p182, %s18, 1
      %p184 = scmp.lt.s32.totalorder %s181, 1
      %s185 = scalar_select %p184, %s181, 1
      %s186 = smul.addr %s183, 2
      %s187 = sadd.s32 %s185, %s186
      %s188 = smul.addr %s187, 4
      %s189 = scalar_lea.vmem %s3, %s188
      %s190 = smul.u32 2, %s19
      %p191 = scmp.lt.s32.totalorder %s18, 1
      %s192 = scalar_select %p191, %s18, 1
      %p193 = scmp.lt.s32.totalorder %s190, 1
      %s194 = scalar_select %p193, %s190, 1
      %s195 = smul.addr %s192, 2
      %s196 = sadd.s32 %s194, %s195
      %s197 = smul.addr %s196, 4
      %s198 = scalar_lea.vmem %s0, %s197
      %s199 = smul.u32 2, %s19
      %s200 = smul.u32 2, %s19
      %p201 = scmp.lt.s32.totalorder %s18, 1
      %s202 = scalar_select %p201, %s18, 1
      %p203 = scmp.lt.s32.totalorder %s200, 1
      %s204 = scalar_select %p203, %s200, 1
      %s205 = smul.addr %s202, 2
      %s206 = sadd.s32 %s204, %s205
      %s207 = smul.addr %s206, 4
      %s208 = scalar_lea.vmem %s3, %s207
      %s209 = smul.u32 2, %s19
      %v210 = vld [vmem:[%s1] sm:$0xf]
      %v211 = vld [vmem:[%s198] sm:$0xff]
      %v212 = vld [vmem:[%s2] sm:$0xf]
      %214 = vset.pattern.permute.xlu0 0
      %215 = vperm.xlu0 %214, %v212
      %v216 = vpop.permute.xlu0 %215
      %v219 = vcombine.high %v211, %v211
      %vm220 = vcmask 31744
      %v222 = vsel %vm220, %v210, 0
      %vm224 = vcmask 1043456
      %v225 = vsel %vm224, %v211, 0
      %v227 = vsel %vm224, %v219, 0
      %229 = vmatprep.subr.mxu0 %v227
      %230 = vmatpush1.msra.mxu0 %v225
      %231 = vmatprep.subr.mxu0 0.0
      %232 = vmatpush1.msra.mxu0 0.0
      %233 = vmatprep.subr.mxu0 0.0
      %234 = vmatpush1.msra.mxu0 0.0
      %235 = vmatprep.subr.mxu0 0.0
      %236 = vmatpush1.msra.mxu0 0.0
      %237 = vmatprep.subr.mxu0 0.0
      %238 = vmatpush1.msra.mxu0 0.0
      %239 = vmatprep.subr.mxu0 0.0
      %240 = vmatpush1.msra.mxu0 0.0
      %241 = vmatprep.subr.mxu0 0.0
      %242 = vmatpush1.msra.mxu0 0.0
      %243 = vmatprep.subr.mxu0 0.0
      %244 = vmatpush1.msra.mxu0 0.0
      %245 = vmatprep.subr.mxu0 0.0
      %246 = vmatpush1.msra.mxu0 0.0
      %247 = vmatprep.subr.mxu0 0.0
      %248 = vmatpush1.msra.mxu0 0.0
      %249 = vmatprep.subr.mxu0 0.0
      %250 = vmatpush1.msra.mxu0 0.0
      %251 = vmatprep.subr.mxu0 0.0
      %252 = vmatpush1.msra.mxu0 0.0
      %253 = vmatprep.subr.mxu0 0.0
      %254 = vmatpush1.msra.mxu0 0.0
      %255 = vmatprep.subr.mxu0 0.0
      %256 = vmatpush1.msra.mxu0 0.0
      %257 = vmatprep.subr.mxu0 0.0
      %258 = vmatpush1.msra.mxu0 0.0
      %259 = vmatprep.subr.mxu0 0.0
      %260 = vmatpush1.msra.mxu0 0.0
      %261 = vmatprep.subr.mxu0 0.0
      %262 = vmatpush1.msra.mxu0 0.0
      %263 = vmatprep.subr.mxu0 0.0
      %264 = vmatpush1.msra.mxu0 0.0
      %265 = vmatprep.subr.mxu0 0.0
      %266 = vmatpush1.msra.mxu0 0.0
      %267 = vmatprep.subr.mxu0 0.0
      %268 = vmatpush1.msra.mxu0 0.0
      %269 = vmatprep.subr.mxu0 0.0
      %270 = vmatpush1.msra.mxu0 0.0
      %271 = vmatprep.subr.mxu0 0.0
      %272 = vmatpush1.msra.mxu0 0.0
      %273 = vmatprep.subr.mxu0 0.0
      %274 = vmatpush1.msra.mxu0 0.0
      %275 = vmatprep.subr.mxu0 0.0
      %276 = vmatpush1.msra.mxu0 0.0
      %277 = vmatprep.subr.mxu0 0.0
      %278 = vmatpush1.msra.mxu0 0.0
      %279 = vmatprep.subr.mxu0 0.0
      %280 = vmatpush1.msra.mxu0 0.0
      %281 = vmatprep.subr.mxu0 0.0
      %282 = vmatpush1.msra.mxu0 0.0
      %283 = vmatprep.subr.mxu0 0.0
      %284 = vmatpush1.msra.mxu0 0.0
      %285 = vmatprep.subr.mxu0 0.0
      %286 = vmatpush1.msra.mxu0 0.0
      %287 = vmatprep.subr.mxu0 0.0
      %288 = vmatpush1.msra.mxu0 0.0
      %289 = vmatprep.subr.mxu0 0.0
      %290 = vmatpush1.msra.mxu0 0.0
      %291 = vmatprep.subr.mxu0 0.0
      %292 = vmatpush1.msra.mxu0 0.0
      %293 = vmatprep.mubr.f32.mxu0 0.0
      %294 = vmatmul.mubr.f32.gmra.mrb[0].mxu0 %v222
      %v295 = vpop.f32.mrb[0].mxu0
      %v296 = vadd.f32 %v216, %v295
      %v297 = vpop.f32.mrb[0].mxu0
      %v298 = vadd.f32 %v216, %v297
      %299 = vdwg.mxu0
      %v300 = vxor.u32 %v296, 2147483648
      %v301 = vxor.u32 %v298, 2147483648
      %v302 = vmul.f32 %v300, 1.442695
      %v303 = vpow.pop %v302
      %v304 = vmul.f32 %v301, 1.442695
      %v305 = vpow.pop %v304
      %v306 = vadd.f32 %v303, 1.0
      %v307 = vadd.f32 %v305, 1.0
      %v308 = vrcp.pop %v306
      %v309 = vmul.f32 1.0, %v308
      %v310 = vrcp.pop %v307
      %v311 = vmul.f32 1.0, %v310
      %v312 = vmul.f32 %v296, %v309
      %v313 = vmul.f32 %v298, %v311
      %v316 = vcombine.low %v312, %v313
      %318 = vst [vmem:[%s208] sm:$0xff] %v316
      %s319 = smul.u32 2, %s19
      %p320 = scmp.lt.s32.totalorder %s18, 1
      %s321 = scalar_select %p320, %s18, 1
      %p322 = scmp.lt.s32.totalorder %s319, 1
      %s323 = scalar_select %p322, %s319, 1
      %s324 = smul.addr %s321, 2
      %s325 = sadd.s32 %s323, %s324
      %s326 = smul.addr %s325, 4
      %s327 = scalar_lea.vmem %s3, %s326
      // Predicated region
      $region33: #{_ghost_conv_forward.2} parent=31 // pred_check
        %p328 = pneg %p116
      $region34: #{_ghost_conv_forward.2} parent=31 // pred_check_branch
        %330 = sbr.rel (%p328) target = $region36
      $region35: #{_ghost_conv_forward.2} parent=31 // pred_region
        %s331 = smul.u32 2, %s19
      $region36: #{_ghost_conv_forward.2} parent=31 // pred_fallthru
        _
    $region32: #{_ghost_conv_forward.2} parent=5 // pred_fallthru
      _
    %p332 = scmp.le.s32.totalorder 2, %s9
    // Predicated region
    $region37: #{_ghost_conv_forward.2} parent=5 // pred_check
      %p333 = pneg %p332
    $region38: #{_ghost_conv_forward.2} parent=5 // pred_check_branch
      %335 = sbr.rel (%p333) target = $region40
    $region39: #{_ghost_conv_forward.2} parent=5 // pred_region
      %s336 = ssub.s32 %s9, 2
      // Predicated region
      $region41: #{_ghost_conv_forward.2} parent=39 // pred_check
        %p337 = pneg %p122
      $region42: #{_ghost_conv_forward.2} parent=39 // pred_check_branch
        %339 = sbr.rel (%p337) target = $region44
      $region43: #{_ghost_conv_forward.2} parent=39 // pred_region
        %s340 = smul.u32 2, %s21
        %p341 = scmp.lt.s32.totalorder %s20, 1
        %s342 = scalar_select %p341, %s20, 1
        %p343 = scmp.lt.s32.totalorder %s340, 1
        %s344 = scalar_select %p343, %s340, 1
        %s345 = smul.addr %s342, 2
        %s346 = sadd.s32 %s344, %s345
        %s347 = smul.addr %s346, 4
        %s348 = scalar_lea.vmem %s3, %s347
      $region44: #{_ghost_conv_forward.2} parent=39 // pred_fallthru
        _
    $region40: #{_ghost_conv_forward.2} parent=5 // pred_fallthru
      _
  $region6: #{_ghost_conv_forward.2} parent=0 // loop_footer
    %s13 = sadd.s32 1, %s9
  $region7: #{_ghost_conv_forward.2} parent=0 // loop_footer_branch
    %8 = sbr.rel target = $region3
  $region8: #{_ghost_conv_forward.2} parent=0 // loop_exit
    _

// kernel: _ghost_conv_forward.3
$region0: #{_ghost_conv_forward.3}
  #allocation0 [shape = 'u32[]', space=smem, size = 0x4, offset = 0x4, fixed_abs, tag = 'smem constant byte address 0x4 - core index']
  #allocation1 [shape = 'u32[144,128]{1,0:T(1,128)}', space=vmem, size = 0x12000, scoped, tag = 'internal scratch']
  #allocation2 [shape = 'f32[4,24,128]{2,1,0:T(8,128)}', space=vmem, size = 0xc000, scoped, tag = 'scratch operand']
  %s0 = inlined_call_operand.vmem [shape: f32[2,4,16,16], index: 0, kind: input, shape index: {}]
  %s1 = inlined_call_operand.vmem [shape: f32[4,5,5], index: 1, kind: input, shape index: {}]
  %s2 = inlined_call_operand.vmem [shape: f32[4,1,1], index: 2, kind: input, shape index: {}]
  %s3 = inlined_call_operand.hbm [shape: f32[2,2,4,16,16], index: 3, kind: output, shape index: {}]
  %s4 = sld [smem:[#allocation0]]
  $region45: #{_ghost_conv_forward.3} parent=0
    _
  %s6 = ssub.s32 1, %s4
  %s7 = scalar_select 0, %s6, %s4
  $region1: #{_ghost_conv_forward.3} parent=0
    #allocation3 [shape = 'u8[131072]{0}', space=vmem, size = 0x20000, scoped, tag = 'output window, operand 0']
    #allocation4 [shape = 's32[2]{0}', space=sflag, size = 0x8, scoped, tag = 'scoped memory for _ghost_conv_forward.3']
    %8 = vsyncpa [#allocation4], 0
    %s9 = scalar_lea.sflag [#allocation4], 1
    %10 = vsyncpa %s9, 0
    loop: start=0, step=1, limit=4
    $region2: #{_ghost_conv_forward.3} parent=1 // loop_pre_header
      _
    $region3: #{_ghost_conv_forward.3} parent=1 // loop_header
      %s12 = sphi 0, %s16
      %p13 = scmp.ge.s32.totalorder %s12, 4
      %s19 = sphi 0, %s31
      %s20 = sphi 0, %s27
      %s21 = sphi 0, %s19
      %s22 = sphi 0, %s20
      %s23 = sphi 0, %s21
      %s24 = sphi 0, %s22
      %s36 = sphi 0, %s38
      %s39 = sphi 0, %s36
      %s40 = sphi 0, %s39
      %s56 = sphi 0, %s40
      %s62 = sphi 0, %s64
      %s65 = sphi 0, %s62
      %s66 = sphi 0, %s65
      %s82 = sphi 0, %s66
      %s88 = sphi 0, %s90
      %s91 = sphi 0, %s88
      %s92 = sphi 0, %s91
      %s108 = sphi 0, %s92
      %s116 = sphi 0, %s118
      %s119 = sphi 0, %s116
      %s120 = sphi 0, %s119
      %s136 = sphi 0, %s120
    $region4: #{_ghost_conv_forward.3} parent=1 // loop_header_branch
      %15 = sbr.rel (%p13) target = $region8
    $region5: #{_ghost_conv_forward.3} parent=1 // loop_body
      %s17 = ssub.s32 %s12, 1
      %s18 = ssub.s32 %s12, 2
      %s25 = sadd.s32 1, %s20
      %p26 = scmp.ge.s32.totalorder %s25, 1
      %s27 = scalar_select %p26, 0, %s25
      %s28 = sadd.s32 1, %s19
      %s29 = scalar_select %p26, %s28, %s19
      %p30 = scmp.ge.s32.totalorder %s29, 2
      %s31 = scalar_select %p30, 0, %s29
      %s32 = ssub.s32 %s19, %s31
      %s33 = ssub.s32 %s20, %s27
      %s34 = sor.u32 %s32, %s33
      %p35 = scmp.eq.s32.totalorder %s34, 0
      %s37 = sadd.s32 %s36, 1
      %s38 = scalar_select %p35, %s36, %s37
      %p41 = pneg %p35
      %p42 = scmp.eq.s32.totalorder %s12, 1
      %p43 = por %p41, %p42
      %p44 = scmp.ne.s32.totalorder %s36, %s39
      %p45 = scmp.eq.s32.totalorder %s12, 0
      %p46 = por %p44, %p45
      %p47 = scmp.ne.s32.totalorder %s36, %s39
      %p48 = scmp.eq.s32.totalorder %s17, 1
      %p49 = por %p47, %p48
      %p50 = scmp.ne.s32.totalorder %s39, %s40
      %p51 = scmp.eq.s32.totalorder %s17, 0
      %p52 = por %p50, %p51
      %p53 = scmp.ne.s32.totalorder %s39, %s40
      %p54 = scmp.eq.s32.totalorder %s18, 1
      %p55 = por %p53, %p54
      %p57 = scmp.ne.s32.totalorder %s40, %s56
      %p58 = scmp.eq.s32.totalorder %s18, 0
      %p59 = por %p57, %p58
      %s60 = ssub.s32 %s20, %s27
      %p61 = scmp.eq.s32.totalorder %s60, 0
      %s63 = sadd.s32 %s62, 1
      %s64 = scalar_select %p61, %s62, %s63
      %p67 = pneg %p61
      %p68 = scmp.eq.s32.totalorder %s12, 1
      %p69 = por %p67, %p68
      %p70 = scmp.ne.s32.totalorder %s62, %s65
      %p71 = scmp.eq.s32.totalorder %s12, 0
      %p72 = por %p70, %p71
      %p73 = scmp.ne.s32.totalorder %s62, %s65
      %p74 = scmp.eq.s32.totalorder %s17, 1
      %p75 = por %p73, %p74
      %p76 = scmp.ne.s32.totalorder %s65, %s66
      %p77 = scmp.eq.s32.totalorder %s17, 0
      %p78 = por %p76, %p77
      %p79 = scmp.ne.s32.totalorder %s65, %s66
      %p80 = scmp.eq.s32.totalorder %s18, 1
      %p81 = por %p79, %p80
      %p83 = scmp.ne.s32.totalorder %s66, %s82
      %p84 = scmp.eq.s32.totalorder %s18, 0
      %p85 = por %p83, %p84
      %s86 = ssub.s32 %s20, %s27
      %p87 = scmp.eq.s32.totalorder %s86, 0
      %s89 = sadd.s32 %s88, 1
      %s90 = scalar_select %p87, %s88, %s89
      %p93 = pneg %p87
      %p94 = scmp.eq.s32.totalorder %s12, 1
      %p95 = por %p93, %p94
      %p96 = scmp.ne.s32.totalorder %s88, %s91
      %p97 = scmp.eq.s32.totalorder %s12, 0
      %p98 = por %p96, %p97
      %p99 = scmp.ne.s32.totalorder %s88, %s91
      %p100 = scmp.eq.s32.totalorder %s17, 1
      %p101 = por %p99, %p100
      %p102 = scmp.ne.s32.totalorder %s91, %s92
      %p103 = scmp.eq.s32.totalorder %s17, 0
      %p104 = por %p102, %p103
      %p105 = scmp.ne.s32.totalorder %s91, %s92
      %p106 = scmp.eq.s32.totalorder %s18, 1
      %p107 = por %p105, %p106
      %p109 = scmp.ne.s32.totalorder %s92, %s108
      %p110 = scmp.eq.s32.totalorder %s18, 0
      %p111 = por %p109, %p110
      %s112 = ssub.s32 %s19, %s31
      %s113 = ssub.s32 %s20, %s27
      %s114 = sor.u32 %s112, %s113
      %p115 = scmp.eq.s32.totalorder %s114, 0
      %s117 = sadd.s32 %s116, 1
      %s118 = scalar_select %p115, %s116, %s117
      %p121 = pneg %p115
      %p122 = scmp.eq.s32.totalorder %s12, 1
      %p123 = por %p121, %p122
      %p124 = scmp.ne.s32.totalorder %s116, %s119
      %p125 = scmp.eq.s32.totalorder %s12, 0
      %p126 = por %p124, %p125
      %p127 = scmp.ne.s32.totalorder %s116, %s119
      %p128 = scmp.eq.s32.totalorder %s17, 1
      %p129 = por %p127, %p128
      %p130 = scmp.ne.s32.totalorder %s119, %s120
      %p131 = scmp.eq.s32.totalorder %s17, 0
      %p132 = por %p130, %p131
      %p133 = scmp.ne.s32.totalorder %s119, %s120
      %p134 = scmp.eq.s32.totalorder %s18, 1
      %p135 = por %p133, %p134
      %p137 = scmp.ne.s32.totalorder %s120, %s136
      %p138 = scmp.eq.s32.totalorder %s18, 0
      %p139 = por %p137, %p138
      %p140 = scmp.le.s32.totalorder 1, %s12
      %p141 = scmp.lt.s32.totalorder %s12, 3
      %p142 = pnand %p140, %p141
      %p143 = pneg %p142
      // Predicated region
      $region9: #{_ghost_conv_forward.3} parent=5 // pred_check
        _
      $region10: #{_ghost_conv_forward.3} parent=5 // pred_check_branch
        %145 = sbr.rel (%p142) target = $region12
      $region11: #{_ghost_conv_forward.3} parent=5 // pred_region
        %s146 = ssub.s32 %s12, 1
        // Predicated region
        $region13: #{_ghost_conv_forward.3} parent=11 // pred_check
          %p147 = pneg %p78
        $region14: #{_ghost_conv_forward.3} parent=11 // pred_check_branch
          %149 = sbr.rel (%p147) target = $region16
        $region15: #{_ghost_conv_forward.3} parent=11 // pred_region
          %s150 = smul.u32 4, %s22
          %p151 = scmp.lt.s32.totalorder %s150, 3
          %s152 = scalar_select %p151, %s150, 3
          %s153 = smul.addr %s152, 8
          %s154 = scalar_lea.vmem %s1, %s153
          %s155 = smul.u32 4, %s22
        $region16: #{_ghost_conv_forward.3} parent=11 // pred_fallthru
          _
        // Predicated region
        $region17: #{_ghost_conv_forward.3} parent=11 // pred_check
          %p156 = pneg %p104
        $region18: #{_ghost_conv_forward.3} parent=11 // pred_check_branch
          %158 = sbr.rel (%p156) target = $region20
        $region19: #{_ghost_conv_forward.3} parent=11 // pred_region
          %s159 = smul.u32 4, %s22
          %p160 = scmp.lt.s32.totalorder %s159, 3
          %s161 = scalar_select %p160, %s159, 3
          %s162 = scalar_lea.vmem %s2, %s161
          %s163 = smul.u32 4, %s22
        $region20: #{_ghost_conv_forward.3} parent=11 // pred_fallthru
          _
      $region12: #{_ghost_conv_forward.3} parent=5 // pred_fallthru
        _
      %p164 = scmp.lt.s32.totalorder %s12, 2
      // Predicated region
      $region21: #{_ghost_conv_forward.3} parent=5 // pred_check
        %p165 = pneg %p164
      $region22: #{_ghost_conv_forward.3} parent=5 // pred_check_branch
        %167 = sbr.rel (%p165) target = $region24
      $region23: #{_ghost_conv_forward.3} parent=5 // pred_region
        // Predicated region
        $region25: #{_ghost_conv_forward.3} parent=23 // pred_check
          %p168 = pneg %p46
        $region26: #{_ghost_conv_forward.3} parent=23 // pred_check_branch
          %170 = sbr.rel (%p168) target = $region28
        $region27: #{_ghost_conv_forward.3} parent=23 // pred_region
          %s171 = smul.u32 4, %s20
          %p172 = scmp.lt.s32.totalorder %s19, 1
          %s173 = scalar_select %p172, %s19, 1
          %p174 = scmp.lt.s32.totalorder %s171, 3
          %s175 = scalar_select %p174, %s171, 3
          %s176 = smul.addr %s175, 2
          %s177 = smul.addr %s173, 8
          %s178 = sadd.s32 %s176, %s177
          %s179 = smul.addr %s178, 8
          %s180 = scalar_lea.vmem %s0, %s179
          %s181 = smul.u32 4, %s20
        $region28: #{_ghost_conv_forward.3} parent=23 // pred_fallthru
          _
      $region24: #{_ghost_conv_forward.3} parent=5 // pred_fallthru
        _
      %p182 = scmp.le.s32.totalorder 1, %s12
      %p183 = scmp.lt.s32.totalorder %s12, 3
      %p184 = pnand %p182, %p183
      %p185 = pneg %p184
      // Predicated region
      $region29: #{_ghost_conv_forward.3} parent=5 // pred_check
        _
      $region30: #{_ghost_conv_forward.3} parent=5 // pred_check_branch
        %187 = sbr.rel (%p184) target = $region32
      $region31: #{_ghost_conv_forward.3} parent=5 // pred_region
        %s188 = ssub.s32 %s12, 1
        %s189 = smul.u32 4, %s22
        %p190 = scmp.lt.s32.totalorder %s21, 1
        %s191 = scalar_select %p190, %s21, 1
        %p192 = scmp.lt.s32.totalorder %s189, 3
        %s193 = scalar_select %p192, %s189, 3
        %s194 = smul.addr %s193, 2
        %s195 = smul.addr %s191, 8
        %s196 = sadd.s32 %s194, %s195
        %s197 = smul.addr %s196, 8
        %s198 = scalar_lea.vmem %s0, %s197
        %p199 = pneg %p52
        %p200 = pneg %p49
        %s201 = smul.u32 4, %s22
        %p202 = scmp.lt.s32.totalorder %s201, 3
        %s203 = scalar_select %p202, %s201, 3
        %s204 = smul.addr %s203, 8
        %s205 = scalar_lea.vmem %s1, %s204
        %p206 = pneg %p78
        %p207 = pneg %p75
        %s208 = smul.u32 4, %s22
        %p209 = scmp.lt.s32.totalorder %s208, 3
        %s210 = scalar_select %p209, %s208, 3
        %s211 = scalar_lea.vmem %s2, %s210
        %p212 = pneg %p104
        %p213 = pneg %p101
        %p214 = pneg %p132
        %p215 = pneg %p129
        %s216 = sand.u32 %s119, 1
        %s217 = scalar_lea.sflag [#allocation4], %s216
        %s218 = sand.u32 %s119, 1
        %s219 = smul.addr %s218, 128
        %s220 = scalar_lea.vmem [#allocation3], %s219
        %s221 = smul.u32 4, %s22
        %p222 = scmp.lt.s32.totalorder %s21, 1
        %s223 = scalar_select %p222, %s21, 1
        %p224 = scmp.lt.s32.totalorder %s221, 3
        %s225 = scalar_select %p224, %s221, 3
        %s226 = smul.addr %s225, 2
        %s227 = smul.addr %s223, 8
        %s228 = sadd.s32 %s226, %s227
        %s229 = smul.addr %s228, 8
        %s230 = scalar_lea.vmem %s0, %s229
        %s231 = smul.u32 4, %s22
        %s232 = smul.u32 4, %s22
        %p233 = scmp.lt.s32.totalorder %s232, 3
        %s234 = scalar_select %p233, %s232, 3
        %s235 = smul.addr %s234, 8
        %s236 = scalar_lea.vmem %s1, %s235
        %s237 = smul.u32 4, %s22
        %s238 = smul.u32 4, %s22
        %p239 = scmp.lt.s32.totalorder %s238, 3
        %s240 = scalar_select %p239, %s238, 3
        %s241 = scalar_lea.vmem %s2, %s240
        %s242 = smul.u32 4, %s22
        %s243 = smul.u32 4, %s22
        %244 = vst [vmem:[#allocation2] sm:$0x3] 0.0
        %245 = vst [vmem:[#allocation2 + $0x18] sm:$0x3] 0.0
        %246 = vst [vmem:[#allocation2 + $0x30] sm:$0x3] 0.0
        %247 = vst [vmem:[#allocation2 + $0x48] sm:$0x3] 0.0
        %248 = vst [vmem:[#allocation2 + $0x12] sm:$0x3] 0.0
        %249 = vst [vmem:[#allocation2 + $0x2a] sm:$0x3] 0.0
        %250 = vst [vmem:[#allocation2 + $0x42] sm:$0x3] 0.0
        %251 = vst [vmem:[#allocation2 + $0x5a] sm:$0x3] 0.0
        %vm252 = vcmask 15360
        %253 = vst.msk [vmem:[#allocation2 + $0x2] sm:$0xff] %vm252, 0.0
        %254 = vst.msk [vmem:[#allocation2 + $0xa] sm:$0xff] %vm252, 0.0
        %255 = vst.msk [vmem:[#allocation2 + $0x1a] sm:$0xff] %vm252, 0.0
        %256 = vst.msk [vmem:[#allocation2 + $0x22] sm:$0xff] %vm252, 0.0
        %257 = vst.msk [vmem:[#allocation2 + $0x32] sm:$0xff] %vm252, 0.0
        %258 = vst.msk [vmem:[#allocation2 + $0x3a] sm:$0xff] %vm252, 0.0
        %259 = vst.msk [vmem:[#allocation2 + $0x4a] sm:$0xff] %vm252, 0.0
        %260 = vst.msk [vmem:[#allocation2 + $0x52] sm:$0xff] %vm252, 0.0
        %vm261 = vcmask 162960
        %262 = vst.msk [vmem:[#allocation2 + $0x2] sm:$0xff] %vm261, 0.0
        %263 = vst.msk [vmem:[#allocation2 + $0xa] sm:$0xff] %vm261, 0.0
        %264 = vst.msk [vmem:[#allocation2 + $0x1a] sm:$0xff] %vm261, 0.0
        %265 = vst.msk [vmem:[#allocation2 + $0x22] sm:$0xff] %vm261, 0.0
        %266 = vst.msk [vmem:[#allocation2 + $0x32] sm:$0xff] %vm261, 0.0
        %267 = vst.msk [vmem:[#allocation2 + $0x3a] sm:$0xff] %vm261, 0.0
        %268 = vst.msk [vmem:[#allocation2 + $0x4a] sm:$0xff] %vm261, 0.0
        %269 = vst.msk [vmem:[#allocation2 + $0x52] sm:$0xff] %vm261, 0.0
        %v270 = vld [vmem:[%s230] sm:$0xff]
        %v271 = vld [vmem:[%s230 + $0x8] sm:$0xff]
        %v272 = vld [vmem:[%s230 + $0x10] sm:$0xff]
        %v273 = vld [vmem:[%s230 + $0x18] sm:$0xff]
        %v274 = vld [vmem:[%s230 + $0x20] sm:$0xff]
        %v275 = vld [vmem:[%s230 + $0x28] sm:$0xff]
        %v276 = vld [vmem:[%s230 + $0x30] sm:$0xff]
        %v277 = vld [vmem:[%s230 + $0x38] sm:$0xff]
        %vm278 = vcmask 130048
        %279 = vst.msk [vmem:[%s220] sm:$0xff] %vm278, %v270
        %280 = vst.msk [vmem:[%s220 + $0x8] sm:$0xff] %vm278, %v271
        %281 = vst.msk [vmem:[%s220 + $0x10] sm:$0xff] %vm278, %v272
        %282 = vst.msk [vmem:[%s220 + $0x18] sm:$0xff] %vm278, %v273
        %283 = vst.msk [vmem:[%s220 + $0x20] sm:$0xff] %vm278, %v274
        %284 = vst.msk [vmem:[%s220 + $0x28] sm:$0xff] %vm278, %v275
        %285 = vst.msk [vmem:[%s220 + $0x30] sm:$0xff] %vm278, %v276
        %286 = vst.msk [vmem:[%s220 + $0x38] sm:$0xff] %vm278, %v277
        %295 = vrot.lane.b32.xlu0 %v270, 2
        %v296 = vpop.permute.xlu0 %295
        %297 = vrot.lane.b32.xlu0 %v271, 2
        %v298 = vpop.permute.xlu0 %297
        %299 = vrot.lane.b32.xlu0 %v272, 2
        %v300 = vpop.permute.xlu0 %299
        %301 = vrot.lane.b32.xlu0 %v273, 2
        %v302 = vpop.permute.xlu0 %301
        %303 = vrot.lane.b32.xlu0 %v274, 2
        %v304 = vpop.permute.xlu0 %303
        %305 = vrot.lane.b32.xlu0 %v275, 2
        %v306 = vpop.permute.xlu0 %305
        %307 = vrot.lane.b32.xlu0 %v276, 2
        %v308 = vpop.permute.xlu0 %307
        %309 = vrot.lane.b32.xlu0 %v277, 2
        %v310 = vpop.permute.xlu0 %309
        %vm319 = vcmask 146448
        %320 = vst.msk [vmem:[#allocation2 + $0x2] sm:$0xff] %vm319, %v296
        %321 = vst.msk [vmem:[#allocation2 + $0xa] sm:$0xff] %vm319, %v298
        %322 = vst.msk [vmem:[#allocation2 + $0x1a] sm:$0xff] %vm319, %v300
        %323 = vst.msk [vmem:[#allocation2 + $0x22] sm:$0xff] %vm319, %v302
        %324 = vst.msk [vmem:[#allocation2 + $0x32] sm:$0xff] %vm319, %v304
        %325 = vst.msk [vmem:[#allocation2 + $0x3a] sm:$0xff] %vm319, %v306
        %326 = vst.msk [vmem:[#allocation2 + $0x4a] sm:$0xff] %vm319, %v308
        %327 = vst.msk [vmem:[#allocation2 + $0x52] sm:$0xff] %vm319, %v310
        %v328 = vld [vmem:[%s236] sm:$0x1f]
        %v329 = vld [vmem:[%s236 + $0x8] sm:$0x1f]
        %v330 = vld [vmem:[%s236 + $0x10] sm:$0x1f]
        %v331 = vld [vmem:[%s236 + $0x18] sm:$0x1f]
        %v332 = vld [vmem:[%s241] sm:$0x1]
        %v333 = vld [vmem:[%s241 + $0x1] sm:$0x1]
        %v334 = vld [vmem:[%s241 + $0x2] sm:$0x1]
        %v335 = vld [vmem:[%s241 + $0x3] sm:$0x1]
        %v336 = vld [vmem:[#allocation2] sm:$0xff]
        %v337 = vld [vmem:[#allocation2 + $0x8] sm:$0xff]
        %v338 = vld [vmem:[#allocation2 + $0x18] sm:$0xff]
        %v339 = vld [vmem:[#allocation2 + $0x20] sm:$0xff]
        %v340 = vld [vmem:[#allocation2 + $0x30] sm:$0xff]
        %v341 = vld [vmem:[#allocation2 + $0x38] sm:$0xff]
        %v342 = vld [vmem:[#allocation2 + $0x48] sm:$0xff]
        %v343 = vld [vmem:[#allocation2 + $0x50] sm:$0xff]
        %s345 = vtos %v328
        %v346 = vstv %s345
        %s349 = vtos %v329
        %v350 = vstv %s349
        %s353 = vtos %v330
        %v354 = vstv %s353
        %s357 = vtos %v331
        %v358 = vstv %s357
        %v360 = vmul.f32 %v336, %v346
        %v361 = vmul.f32 %v337, %v346
        %v362 = vmul.f32 %v338, %v350
        %v363 = vmul.f32 %v339, %v350
        %v364 = vmul.f32 %v340, %v354
        %v365 = vmul.f32 %v341, %v354
        %v366 = vmul.f32 %v342, %v358
        %v367 = vmul.f32 %v343, %v358
        %v368 = vadd.f32 %v360, 0.0
        %v369 = vadd.f32 %v361, 0.0
        %v370 = vadd.f32 %v362, 0.0
        %v371 = vadd.f32 %v363, 0.0
        %v372 = vadd.f32 %v364, 0.0
        %v373 = vadd.f32 %v365, 0.0
        %v374 = vadd.f32 %v366, 0.0
        %v375 = vadd.f32 %v367, 0.0
        %376 = vrot.lane.b32.xlu0 %v328, 127
        %v377 = vpop.permute.xlu0 %376
        %378 = vrot.lane.b32.xlu0 %v329, 127
        %v379 = vpop.permute.xlu0 %378
        %380 = vrot.lane.b32.xlu0 %v330, 127
        %v381 = vpop.permute.xlu0 %380
        %382 = vrot.lane.b32.xlu0 %v331, 127
        %v383 = vpop.permute.xlu0 %382
        %s384 = vtos %v377
        %v385 = vstv %s384
        %s387 = vtos %v379
        %v388 = vstv %s387
        %s390 = vtos %v381
        %v391 = vstv %s390
        %s393 = vtos %v383
        %v394 = vstv %s393
        %v396 = vmul.f32 %v336, %v385
        %v397 = vmul.f32 %v337, %v385
        %v398 = vmul.f32 %v338, %v388
        %v399 = vmul.f32 %v339, %v388
        %v400 = vmul.f32 %v340, %v391
        %v401 = vmul.f32 %v341, %v391
        %v402 = vmul.f32 %v342, %v394
        %v403 = vmul.f32 %v343, %v394
        %412 = vrot.lane.b32.xlu0 %v396, 127
        %v413 = vpop.permute.xlu0 %412
        %414 = vrot.lane.b32.xlu0 %v397, 127
        %v415 = vpop.permute.xlu0 %414
        %416 = vrot.lane.b32.xlu0 %v398, 127
        %v417 = vpop.permute.xlu0 %416
        %418 = vrot.lane.b32.xlu0 %v399, 127
        %v419 = vpop.permute.xlu0 %418
        %420 = vrot.lane.b32.xlu0 %v400, 127
        %v421 = vpop.permute.xlu0 %420
        %422 = vrot.lane.b32.xlu0 %v401, 127
        %v423 = vpop.permute.xlu0 %422
        %424 = vrot.lane.b32.xlu0 %v402, 127
        %v425 = vpop.permute.xlu0 %424
        %426 = vrot.lane.b32.xlu0 %v403, 127
        %v427 = vpop.permute.xlu0 %426
        %v436 = vadd.f32 %v368, %v413
        %v437 = vadd.f32 %v369, %v415
        %v438 = vadd.f32 %v370, %v417
        %v439 = vadd.f32 %v371, %v419
        %v440 = vadd.f32 %v372, %v421
        %v441 = vadd.f32 %v373, %v423
        %v442 = vadd.f32 %v374, %v425
        %v443 = vadd.f32 %v375, %v427
        %444 = vrot.lane.b32.xlu0 %v328, 126
        %v445 = vpop.permute.xlu0 %444
        %446 = vrot.lane.b32.xlu0 %v329, 126
        %v447 = vpop.permute.xlu0 %446
        %448 = vrot.lane.b32.xlu0 %v330, 126
        %v449 = vpop.permute.xlu0 %448
        %450 = vrot.lane.b32.xlu0 %v331, 126
        %v451 = vpop.permute.xlu0 %450
        %s452 = vtos %v445
        %v453 = vstv %s452
        %s455 = vtos %v447
        %v456 = vstv %s455
        %s458 = vtos %v449
        %v459 = vstv %s458
        %s461 = vtos %v451
        %v462 = vstv %s461
        %v464 = vmul.f32 %v336, %v453
        %v465 = vmul.f32 %v337, %v453
        %v466 = vmul.f32 %v338, %v456
        %v467 = vmul.f32 %v339, %v456
        %v468 = vmul.f32 %v340, %v459
        %v469 = vmul.f32 %v341, %v459
        %v470 = vmul.f32 %v342, %v462
        %v471 = vmul.f32 %v343, %v462
        %480 = vrot.lane.b32.xlu0 %v464, 126
        %v481 = vpop.permute.xlu0 %480
        %482 = vrot.lane.b32.xlu0 %v465, 126
        %v483 = vpop.permute.xlu0 %482
        %484 = vrot.lane.b32.xlu0 %v466, 126
        %v485 = vpop.permute.xlu0 %484
        %486 = vrot.lane.b32.xlu0 %v467, 126
        %v487 = vpop.permute.xlu0 %486
        %488 = vrot.lane.b32.xlu0 %v468, 126
        %v489 = vpop.permute.xlu0 %488
        %490 = vrot.lane.b32.xlu0 %v469, 126
        %v491 = vpop.permute.xlu0 %490
        %492 = vrot.lane.b32.xlu0 %v470, 126
        %v493 = vpop.permute.xlu0 %492
        %494 = vrot.lane.b32.xlu0 %v471, 126
        %v495 = vpop.permute.xlu0 %494
        %v504 = vadd.f32 %v436, %v481
        %v505 = vadd.f32 %v437, %v483
        %v506 = vadd.f32 %v438, %v485
        %v507 = vadd.f32 %v439, %v487
        %v508 = vadd.f32 %v440, %v489
        %v509 = vadd.f32 %v441, %v491
        %v510 = vadd.f32 %v442, %v493
        %v511 = vadd.f32 %v443, %v495
        %512 = vrot.lane.b32.xlu0 %v328, 125
        %v513 = vpop.permute.xlu0 %512
        %514 = vrot.lane.b32.xlu0 %v329, 125
        %v515 = vpop.permute.xlu0 %514
        %516 = vrot.lane.b32.xlu0 %v330, 125
        %v517 = vpop.permute.xlu0 %516
        %518 = vrot.lane.b32.xlu0 %v331, 125
        %v519 = vpop.permute.xlu0 %518
        %s520 = vtos %v513
        %v521 = vstv %s520
        %s523 = vtos %v515
        %v524 = vstv %s523
        %s526 = vtos %v517
        %v527 = vstv %s526
        %s529 = vtos %v519
        %v530 = vstv %s529
        %v532 = vmul.f32 %v336, %v521
        %v533 = vmul.f32 %v337, %v521
        %v534 = vmul.f32 %v338, %v524
        %v535 = vmul.f32 %v339, %v524
        %v536 = vmul.f32 %v340, %v527
        %v537 = vmul.f32 %v341, %v527
        %v538 = vmul.f32 %v342, %v530
        %v539 = vmul.f32 %v343, %v530
        %548 = vrot.lane.b32.xlu0 %v532, 125
        %v549 = vpop.permute.xlu0 %548
        %550 = vrot.lane.b32.xlu0 %v533, 125
        %v551 = vpop.permute.xlu0 %550
        %552 = vrot.lane.b32.xlu0 %v534, 125
        %v553 = vpop.permute.xlu0 %552
        %554 = vrot.lane.b32.xlu0 %v535, 125
        %v555 = vpop.permute.xlu0 %554
        %556 = vrot.lane.b32.xlu0 %v536, 125
        %v557 = vpop.permute.xlu0 %556
        %558 = vrot.lane.b32.xlu0 %v537, 125
        %v559 = vpop.permute.xlu0 %558
        %560 = vrot.lane.b32.xlu0 %v538, 125
        %v561 = vpop.permute.xlu0 %560
        %562 = vrot.lane.b32.xlu0 %v539, 125
        %v563 = vpop.permute.xlu0 %562
        %v572 = vadd.f32 %v504, %v549
        %v573 = vadd.f32 %v505, %v551
        %v574 = vadd.f32 %v506, %v553
        %v575 = vadd.f32 %v507, %v555
        %v576 = vadd.f32 %v508, %v557
        %v577 = vadd.f32 %v509, %v559
        %v578 = vadd.f32 %v510, %v561
        %v579 = vadd.f32 %v511, %v563
        %580 = vrot.lane.b32.xlu0 %v328, 124
        %v581 = vpop.permute.xlu0 %580
        %582 = vrot.lane.b32.xlu0 %v329, 124
        %v583 = vpop.permute.xlu0 %582
        %584 = vrot.lane.b32.xlu0 %v330, 124
        %v585 = vpop.permute.xlu0 %584
        %586 = vrot.lane.b32.xlu0 %v331, 124
        %v587 = vpop.permute.xlu0 %586
        %s588 = vtos %v581
        %v589 = vstv %s588
        %s591 = vtos %v583
        %v592 = vstv %s591
        %s594 = vtos %v585
        %v595 = vstv %s594
        %s597 = vtos %v587
        %v598 = vstv %s597
        %v600 = vmul.f32 %v336, %v589
        %v601 = vmul.f32 %v337, %v589
        %v602 = vmul.f32 %v338, %v592
        %v603 = vmul.f32 %v339, %v592
        %v604 = vmul.f32 %v340, %v595
        %v605 = vmul.f32 %v341, %v595
        %v606 = vmul.f32 %v342, %v598
        %v607 = vmul.f32 %v343, %v598
        %616 = vrot.lane.b32.xlu0 %v600, 124
        %v617 = vpop.permute.xlu0 %616
        %618 = vrot.lane.b32.xlu0 %v601, 124
        %v619 = vpop.permute.xlu0 %618
        %620 = vrot.lane.b32.xlu0 %v602, 124
        %v621 = vpop.permute.xlu0 %620
        %622 = vrot.lane.b32.xlu0 %v603, 124
        %v623 = vpop.permute.xlu0 %622
        %624 = vrot.lane.b32.xlu0 %v604, 124
        %v625 = vpop.permute.xlu0 %624
        %626 = vrot.lane.b32.xlu0 %v605, 124
        %v627 = vpop.permute.xlu0 %626
        %628 = vrot.lane.b32.xlu0 %v606, 124
        %v629 = vpop.permute.xlu0 %628
        %630 = vrot.lane.b32.xlu0 %v607, 124
        %v631 = vpop.permute.xlu0 %630
        %v640 = vadd.f32 %v572, %v617
        %v641 = vadd.f32 %v573, %v619
        %v642 = vadd.f32 %v574, %v621
        %v643 = vadd.f32 %v575, %v623
        %v644 = vadd.f32 %v576, %v625
        %v645 = vadd.f32 %v577, %v627
        %v646 = vadd.f32 %v578, %v629
        %v647 = vadd.f32 %v579, %v631
        %s648 = sadd.s32 0, 1
        %s649 = scalar_lea.vmem [#allocation2], %s648
        %v650 = vld [vmem:[%s649] sm:$0xff]
        %v651 = vld [vmem:[%s649 + $0x8] sm:$0xff]
        %v652 = vld [vmem:[%s649 + $0x18] sm:$0xff]
        %v653 = vld [vmem:[%s649 + $0x20] sm:$0xff]
        %v654 = vld [vmem:[%s649 + $0x30] sm:$0xff]
        %v655 = vld [vmem:[%s649 + $0x38] sm:$0xff]
        %v656 = vld [vmem:[%s649 + $0x48] sm:$0xff]
        %v657 = vld [vmem:[%s649 + $0x50] sm:$0xff]
        %v658 = vrot.slane %v328, 1
        %v659 = vrot.slane %v329, 1
        %v660 = vrot.slane %v330, 1
        %v661 = vrot.slane %v331, 1
        %s662 = vtos %v658
        %v663 = vstv %s662
        %s665 = vtos %v659
        %v666 = vstv %s665
        %s668 = vtos %v660
        %v669 = vstv %s668
        %s671 = vtos %v661
        %v672 = vstv %s671
        %v674 = vmul.f32 %v650, %v663
        %v675 = vmul.f32 %v651, %v663
        %v676 = vmul.f32 %v652, %v666
        %v677 = vmul.f32 %v653, %v666
        %v678 = vmul.f32 %v654, %v669
        %v679 = vmul.f32 %v655, %v669
        %v680 = vmul.f32 %v656, %v672
        %v681 = vmul.f32 %v657, %v672
        %v682 = vadd.f32 %v640, %v674
        %v683 = vadd.f32 %v641, %v675
        %v684 = vadd.f32 %v642, %v676
        %v685 = vadd.f32 %v643, %v677
        %v686 = vadd.f32 %v644, %v678
        %v687 = vadd.f32 %v645, %v679
        %v688 = vadd.f32 %v646, %v680
        %v689 = vadd.f32 %v647, %v681
        %690 = vrot.lane.b32.xlu0 %v658, 127
        %v691 = vpop.permute.xlu0 %690
        %692 = vrot.lane.b32.xlu0 %v659, 127
        %v693 = vpop.permute.xlu0 %692
        %694 = vrot.lane.b32.xlu0 %v660, 127
        %v695 = vpop.permute.xlu0 %694
        %696 = vrot.lane.b32.xlu0 %v661, 127
        %v697 = vpop.permute.xlu0 %696
        %s698 = vtos %v691
        %v699 = vstv %s698
        %s701 = vtos %v693
        %v702 = vstv %s701
        %s704 = vtos %v695
        %v705 = vstv %s704
        %s707 = vtos %v697
        %v708 = vstv %s707
        %v710 = vmul.f32 %v650, %v699
        %v711 = vmul.f32 %v651, %v699
        %v712 = vmul.f32 %v652, %v702
        %v713 = vmul.f32 %v653, %v702
        %v714 = vmul.f32 %v654, %v705
        %v715 = vmul.f32 %v655, %v705
        %v716 = vmul.f32 %v656, %v708
        %v717 = vmul.f32 %v657, %v708
        %726 = vrot.lane.b32.xlu0 %v710, 127
        %v727 = vpop.permute.xlu0 %726
        %728 = vrot.lane.b32.xlu0 %v711, 127
        %v729 = vpop.permute.xlu0 %728
        %730 = vrot.lane.b32.xlu0 %v712, 127
        %v731 = vpop.permute.xlu0 %730
        %732 = vrot.lane.b32.xlu0 %v713, 127
        %v733 = vpop.permute.xlu0 %732
        %734 = vrot.lane.b32.xlu0 %v714, 127
        %v735 = vpop.permute.xlu0 %734
        %736 = vrot.lane.b32.xlu0 %v715, 127
        %v737 = vpop.permute.xlu0 %736
        %738 = vrot.lane.b32.xlu0 %v716, 127
        %v739 = vpop.permute.xlu0 %738
        %740 = vrot.lane.b32.xlu0 %v717, 127
        %v741 = vpop.permute.xlu0 %740
        %v750 = vadd.f32 %v682, %v727
        %v751 = vadd.f32 %v683, %v729
        %v752 = vadd.f32 %v684, %v731
        %v753 = vadd.f32 %v685, %v733
        %v754 = vadd.f32 %v686, %v735
        %v755 = vadd.f32 %v687, %v737
        %v756 = vadd.f32 %v688, %v739
        %v757 = vadd.f32 %v689, %v741
        %758 = vrot.lane.b32.xlu0 %v658, 126
        %v759 = vpop.permute.xlu0 %758
        %760 = vrot.lane.b32.xlu0 %v659, 126
        %v761 = vpop.permute.xlu0 %760
        %762 = vrot.lane.b32.xlu0 %v660, 126
        %v763 = vpop.permute.xlu0 %762
        %764 = vrot.lane.b32.xlu0 %v661, 126
        %v765 = vpop.permute.xlu0 %764
        %s766 = vtos %v759
        %v767 = vstv %s766
        %s769 = vtos %v761
        %v770 = vstv %s769
        %s772 = vtos %v763
        %v773 = vstv %s772
        %s775 = vtos %v765
        %v776 = vstv %s775
        %v778 = vmul.f32 %v650, %v767
        %v779 = vmul.f32 %v651, %v767
        %v780 = vmul.f32 %v652, %v770
        %v781 = vmul.f32 %v653, %v770
        %v782 = vmul.f32 %v654, %v773
        %v783 = vmul.f32 %v655, %v773
        %v784 = vmul.f32 %v656, %v776
        %v785 = vmul.f32 %v657, %v776
        %794 = vrot.lane.b32.xlu0 %v778, 126
        %v795 = vpop.permute.xlu0 %794
        %796 = vrot.lane.b32.xlu0 %v779, 126
        %v797 = vpop.permute.xlu0 %796
        %798 = vrot.lane.b32.xlu0 %v780, 126
        %v799 = vpop.permute.xlu0 %798
        %800 = vrot.lane.b32.xlu0 %v781, 126
        %v801 = vpop.permute.xlu0 %800
        %802 = vrot.lane.b32.xlu0 %v782, 126
        %v803 = vpop.permute.xlu0 %802
        %804 = vrot.lane.b32.xlu0 %v783, 126
        %v805 = vpop.permute.xlu0 %804
        %806 = vrot.lane.b32.xlu0 %v784, 126
        %v807 = vpop.permute.xlu0 %806
        %808 = vrot.lane.b32.xlu0 %v785, 126
        %v809 = vpop.permute.xlu0 %808
        %v818 = vadd.f32 %v750, %v795
        %v819 = vadd.f32 %v751, %v797
        %v820 = vadd.f32 %v752, %v799
        %v821 = vadd.f32 %v753, %v801
        %v822 = vadd.f32 %v754, %v803
        %v823 = vadd.f32 %v755, %v805
        %v824 = vadd.f32 %v756, %v807
        %v825 = vadd.f32 %v757, %v809
        %826 = vrot.lane.b32.xlu0 %v658, 125
        %v827 = vpop.permute.xlu0 %826
        %828 = vrot.lane.b32.xlu0 %v659, 125
        %v829 = vpop.permute.xlu0 %828
        %830 = vrot.lane.b32.xlu0 %v660, 125
        %v831 = vpop.permute.xlu0 %830
        %832 = vrot.lane.b32.xlu0 %v661, 125
        %v833 = vpop.permute.xlu0 %832
        %s834 = vtos %v827
        %v835 = vstv %s834
        %s837 = vtos %v829
        %v838 = vstv %s837
        %s840 = vtos %v831
        %v841 = vstv %s840
        %s843 = vtos %v833
        %v844 = vstv %s843
        %v846 = vmul.f32 %v650, %v835
        %v847 = vmul.f32 %v651, %v835
        %v848 = vmul.f32 %v652, %v838
        %v849 = vmul.f32 %v653, %v838
        %v850 = vmul.f32 %v654, %v841
        %v851 = vmul.f32 %v655, %v841
        %v852 = vmul.f32 %v656, %v844
        %v853 = vmul.f32 %v657, %v844
        %862 = vrot.lane.b32.xlu0 %v846, 125
        %v863 = vpop.permute.xlu0 %862
        %864 = vrot.lane.b32.xlu0 %v847, 125
        %v865 = vpop.permute.xlu0 %864
        %866 = vrot.lane.b32.xlu0 %v848, 125
        %v867 = vpop.permute.xlu0 %866
        %868 = vrot.lane.b32.xlu0 %v849, 125
        %v869 = vpop.permute.xlu0 %868
        %870 = vrot.lane.b32.xlu0 %v850, 125
        %v871 = vpop.permute.xlu0 %870
        %872 = vrot.lane.b32.xlu0 %v851, 125
        %v873 = vpop.permute.xlu0 %872
        %874 = vrot.lane.b32.xlu0 %v852, 125
        %v875 = vpop.permute.xlu0 %874
        %876 = vrot.lane.b32.xlu0 %v853, 125
        %v877 = vpop.permute.xlu0 %876
        %v886 = vadd.f32 %v818, %v863
        %v887 = vadd.f32 %v819, %v865
        %v888 = vadd.f32 %v820, %v867
        %v889 = vadd.f32 %v821, %v869
        %v890 = vadd.f32 %v822, %v871
        %v891 = vadd.f32 %v823, %v873
        %v892 = vadd.f32 %v824, %v875
        %v893 = vadd.f32 %v825, %v877
        %894 = vrot.lane.b32.xlu0 %v658, 124
        %v895 = vpop.permute.xlu0 %894
        %896 = vrot.lane.b32.xlu0 %v659, 124
        %v897 = vpop.permute.xlu0 %896
        %898 = vrot.lane.b32.xlu0 %v660, 124
        %v899 = vpop.permute.xlu0 %898
        %900 = vrot.lane.b32.xlu0 %v661, 124
        %v901 = vpop.permute.xlu0 %900
        %s902 = vtos %v895
        %v903 = vstv %s902
        %s905 = vtos %v897
        %v906 = vstv %s905
        %s908 = vtos %v899
        %v909 = vstv %s908
        %s911 = vtos %v901
        %v912 = vstv %s911
        %v914 = vmul.f32 %v650, %v903
        %v915 = vmul.f32 %v651, %v903
        %v916 = vmul.f32 %v652, %v906
        %v917 = vmul.f32 %v653, %v906
        %v918 = vmul.f32 %v654, %v909
        %v919 = vmul.f32 %v655, %v909
        %v920 = vmul.f32 %v656, %v912
        %v921 = vmul.f32 %v657, %v912
        %930 = vrot.lane.b32.xlu0 %v914, 124
        %v931 = vpop.permute.xlu0 %930
        %932 = vrot.lane.b32.xlu0 %v915, 124
        %v933 = vpop.permute.xlu0 %932
        %934 = vrot.lane.b32.xlu0 %v916, 124
        %v935 = vpop.permute.xlu0 %934
        %936 = vrot.lane.b32.xlu0 %v917, 124
        %v937 = vpop.permute.xlu0 %936
        %938 = vrot.lane.b32.xlu0 %v918, 124
        %v939 = vpop.permute.xlu0 %938
        %940 = vrot.lane.b32.xlu0 %v919, 124
        %v941 = vpop.permute.xlu0 %940
        %942 = vrot.lane.b32.xlu0 %v920, 124
        %v943 = vpop.permute.xlu0 %942
        %944 = vrot.lane.b32.xlu0 %v921, 124
        %v945 = vpop.permute.xlu0 %944
        %v954 = vadd.f32 %v886, %v931
        %v955 = vadd.f32 %v887, %v933
        %v956 = vadd.f32 %v888, %v935
        %v957 = vadd.f32 %v889, %v937
        %v958 = vadd.f32 %v890, %v939
        %v959 = vadd.f32 %v891, %v941
        %v960 = vadd.f32 %v892, %v943
        %v961 = vadd.f32 %v893, %v945
        %s962 = sadd.s32 0, 2
        %s963 = scalar_lea.vmem [#allocation2], %s962
        %v964 = vld [vmem:[%s963] sm:$0xff]
        %v965 = vld [vmem:[%s963 + $0x8] sm:$0xff]
        %v966 = vld [vmem:[%s963 + $0x18] sm:$0xff]
        %v967 = vld [vmem:[%s963 + $0x20] sm:$0xff]
        %v968 = vld [vmem:[%s963 + $0x30] sm:$0xff]
        %v969 = vld [vmem:[%s963 + $0x38] sm:$0xff]
        %v970 = vld [vmem:[%s963 + $0x48] sm:$0xff]
        %v971 = vld [vmem:[%s963 + $0x50] sm:$0xff]
        %v972 = vrot.slane %v328, 2
        %v973 = vrot.slane %v329, 2
        %v974 = vrot.slane %v330, 2
        %v975 = vrot.slane %v331, 2
        %s976 = vtos %v972
        %v977 = vstv %s976
        %s979 = vtos %v973
        %v980 = vstv %s979
        %s982 = vtos %v974
        %v983 = vstv %s982
        %s985 = vtos %v975
        %v986 = vstv %s985
        %v988 = vmul.f32 %v964, %v977
        %v989 = vmul.f32 %v965, %v977
        %v990 = vmul.f32 %v966, %v980
        %v991 = vmul.f32 %v967, %v980
        %v992 = vmul.f32 %v968, %v983
        %v993 = vmul.f32 %v969, %v983
        %v994 = vmul.f32 %v970, %v986
        %v995 = vmul.f32 %v971, %v986
        %v996 = vadd.f32 %v954, %v988
        %v997 = vadd.f32 %v955, %v989
        %v998 = vadd.f32 %v956, %v990
        %v999 = vadd.f32 %v957, %v991
        %v1000 = vadd.f32 %v958, %v992
        %v1001 = vadd.f32 %v959, %v993
        %v1002 = vadd.f32 %v960, %v994
        %v1003 = vadd.f32 %v961, %v995
        %1004 = vrot.lane.b32.xlu0 %v972, 127
        %v1005 = vpop.permute.xlu0 %1004
        %1006 = vrot.lane.b32.xlu0 %v973, 127
        %v1007 = vpop.permute.xlu0 %1006
        %1008 = vrot.lane.b32.xlu0 %v974, 127
        %v1009 = vpop.permute.xlu0 %1008
        %1010 = vrot.lane.b32.xlu0 %v975, 127
        %v1011 = vpop.permute.xlu0 %1010
        %s1012 = vtos %v1005
        %v1013 = vstv %s1012
        %s1015 = vtos %v1007
        %v1016 = vstv %s1015
        %s1018 = vtos %v1009
        %v1019 = vstv %s1018
        %s1021 = vtos %v1011
        %v1022 = vstv %s1021
        %v1024 = vmul.f32 %v964, %v1013
        %v1025 = vmul.f32 %v965, %v1013
        %v1026 = vmul.f32 %v966, %v1016
        %v1027 = vmul.f32 %v967, %v1016
        %v1028 = vmul.f32 %v968, %v1019
        %v1029 = vmul.f32 %v969, %v1019
        %v1030 = vmul.f32 %v970, %v1022
        %v1031 = vmul.f32 %v971, %v1022
        %1040 = vrot.lane.b32.xlu0 %v1024, 127
        %v1041 = vpop.permute.xlu0 %1040
        %1042 = vrot.lane.b32.xlu0 %v1025, 127
        %v1043 = vpop.permute.xlu0 %1042
        %1044 = vrot.lane.b32.xlu0 %v1026, 127
        %v1045 = vpop.permute.xlu0 %1044
        %1046 = vrot.lane.b32.xlu0 %v1027, 127
        %v1047 = vpop.permute.xlu0 %1046
        %1048 = vrot.lane.b32.xlu0 %v1028, 127
        %v1049 = vpop.permute.xlu0 %1048
        %1050 = vrot.lane.b32.xlu0 %v1029, 127
        %v1051 = vpop.permute.xlu0 %1050
        %1052 = vrot.lane.b32.xlu0 %v1030, 127
        %v1053 = vpop.permute.xlu0 %1052
        %1054 = vrot.lane.b32.xlu0 %v1031, 127
        %v1055 = vpop.permute.xlu0 %1054
        %v1064 = vadd.f32 %v996, %v1041
        %v1065 = vadd.f32 %v997, %v1043
        %v1066 = vadd.f32 %v998, %v1045
        %v1067 = vadd.f32 %v999, %v1047
        %v1068 = vadd.f32 %v1000, %v1049
        %v1069 = vadd.f32 %v1001, %v1051
        %v1070 = vadd.f32 %v1002, %v1053
        %v1071 = vadd.f32 %v1003, %v1055
        %1072 = vrot.lane.b32.xlu0 %v972, 126
        %v1073 = vpop.permute.xlu0 %1072
        %1074 = vrot.lane.b32.xlu0 %v973, 126
        %v1075 = vpop.permute.xlu0 %1074
        %1076 = vrot.lane.b32.xlu0 %v974, 126
        %v1077 = vpop.permute.xlu0 %1076
        %1078 = vrot.lane.b32.xlu0 %v975, 126
        %v1079 = vpop.permute.xlu0 %1078
        %s1080 = vtos %v1073
        %v1081 = vstv %s1080
        %s1083 = vtos %v1075
        %v1084 = vstv %s1083
        %s1086 = vtos %v1077
        %v1087 = vstv %s1086
        %s1089 = vtos %v1079
        %v1090 = vstv %s1089
        %v1092 = vmul.f32 %v964, %v1081
        %v1093 = vmul.f32 %v965, %v1081
        %v1094 = vmul.f32 %v966, %v1084
        %v1095 = vmul.f32 %v967, %v1084
        %v1096 = vmul.f32 %v968, %v1087
        %v1097 = vmul.f32 %v969, %v1087
        %v1098 = vmul.f32 %v970, %v1090
        %v1099 = vmul.f32 %v971, %v1090
        %1108 = vrot.lane.b32.xlu0 %v1092, 126
        %v1109 = vpop.permute.xlu0 %1108
        %1110 = vrot.lane.b32.xlu0 %v1093, 126
        %v1111 = vpop.permute.xlu0 %1110
        %1112 = vrot.lane.b32.xlu0 %v1094, 126
        %v1113 = vpop.permute.xlu0 %1112
        %1114 = vrot.lane.b32.xlu0 %v1095, 126
        %v1115 = vpop.permute.xlu0 %1114
        %1116 = vrot.lane.b32.xlu0 %v1096, 126
        %v1117 = vpop.permute.xlu0 %1116
        %1118 = vrot.lane.b32.xlu0 %v1097, 126
        %v1119 = vpop.permute.xlu0 %1118
        %1120 = vrot.lane.b32.xlu0 %v1098, 126
        %v1121 = vpop.permute.xlu0 %1120
        %1122 = vrot.lane.b32.xlu0 %v1099, 126
        %v1123 = vpop.permute.xlu0 %1122
        %v1132 = vadd.f32 %v1064, %v1109
        %v1133 = vadd.f32 %v1065, %v1111
        %v1134 = vadd.f32 %v1066, %v1113
        %v1135 = vadd.f32 %v1067, %v1115
        %v1136 = vadd.f32 %v1068, %v1117
        %v1137 = vadd.f32 %v1069, %v1119
        %v1138 = vadd.f32 %v1070, %v1121
        %v1139 = vadd.f32 %v1071, %v1123
        %1140 = vrot.lane.b32.xlu0 %v972, 125
        %v1141 = vpop.permute.xlu0 %1140
        %1142 = vrot.lane.b32.xlu0 %v973, 125
        %v1143 = vpop.permute.xlu0 %1142
        %1144 = vrot.lane.b32.xlu0 %v974, 125
        %v1145 = vpop.permute.xlu0 %1144
        %1146 = vrot.lane.b32.xlu0 %v975, 125
        %v1147 = vpop.permute.xlu0 %1146
        %s1148 = vtos %v1141
        %v1149 = vstv %s1148
        %s1151 = vtos %v1143
        %v1152 = vstv %s1151
        %s1154 = vtos %v1145
        %v1155 = vstv %s1154
        %s1157 = vtos %v1147
        %v1158 = vstv %s1157
        %v1160 = vmul.f32 %v964, %v1149
        %v1161 = vmul.f32 %v965, %v1149
        %v1162 = vmul.f32 %v966, %v1152
        %v1163 = vmul.f32 %v967, %v1152
        %v1164 = vmul.f32 %v968, %v1155
        %v1165 = vmul.f32 %v969, %v1155
        %v1166 = vmul.f32 %v970, %v1158
        %v1167 = vmul.f32 %v971, %v1158
        %1176 = vrot.lane.b32.xlu0 %v1160, 125
        %v1177 = vpop.permute.xlu0 %1176
        %1178 = vrot.lane.b32.xlu0 %v1161, 125
        %v1179 = vpop.permute.xlu0 %1178
        %1180 = vrot.lane.b32.xlu0 %v1162, 125
        %v1181 = vpop.permute.xlu0 %1180
        %1182 = vrot.lane.b32.xlu0 %v1163, 125
        %v1183 = vpop.permute.xlu0 %1182
        %1184 = vrot.lane.b32.xlu0 %v1164, 125
        %v1185 = vpop.permute.xlu0 %1184
        %1186 = vrot.lane.b32.xlu0 %v1165, 125
        %v1187 = vpop.permute.xlu0 %1186
        %1188 = vrot.lane.b32.xlu0 %v1166, 125
        %v1189 = vpop.permute.xlu0 %1188
        %1190 = vrot.lane.b32.xlu0 %v1167, 125
        %v1191 = vpop.permute.xlu0 %1190
        %v1200 = vadd.f32 %v1132, %v1177
        %v1201 = vadd.f32 %v1133, %v1179
        %v1202 = vadd.f32 %v1134, %v1181
        %v1203 = vadd.f32 %v1135, %v1183
        %v1204 = vadd.f32 %v1136, %v1185
        %v1205 = vadd.f32 %v1137, %v1187
        %v1206 = vadd.f32 %v1138, %v1189
        %v1207 = vadd.f32 %v1139, %v1191
        %1208 = vrot.lane.b32.xlu0 %v972, 124
        %v1209 = vpop.permute.xlu0 %1208
        %1210 = vrot.lane.b32.xlu0 %v973, 124
        %v1211 = vpop.permute.xlu0 %1210
        %1212 = vrot.lane.b32.xlu0 %v974, 124
        %v1213 = vpop.permute.xlu0 %1212
        %1214 = vrot.lane.b32.xlu0 %v975, 124
        %v1215 = vpop.permute.xlu0 %1214
        %s1216 = vtos %v1209
        %v1217 = vstv %s1216
        %s1219 = vtos %v1211
        %v1220 = vstv %s1219
        %s1222 = vtos %v1213
        %v1223 = vstv %s1222
        %s1225 = vtos %v1215
        %v1226 = vstv %s1225
        %v1228 = vmul.f32 %v964, %v1217
        %v1229 = vmul.f32 %v965, %v1217
        %v1230 = vmul.f32 %v966, %v1220
        %v1231 = vmul.f32 %v967, %v1220
        %v1232 = vmul.f32 %v968, %v1223
        %v1233 = vmul.f32 %v969, %v1223
        %v1234 = vmul.f32 %v970, %v1226
        %v1235 = vmul.f32 %v971, %v1226
        %1244 = vrot.lane.b32.xlu0 %v1228, 124
        %v1245 = vpop.permute.xlu0 %1244
        %1246 = vrot.lane.b32.xlu0 %v1229, 124
        %v1247 = vpop.permute.xlu0 %1246
        %1248 = vrot.lane.b32.xlu0 %v1230, 124
        %v1249 = vpop.permute.xlu0 %1248
        %1250 = vrot.lane.b32.xlu0 %v1231, 124
        %v1251 = vpop.permute.xlu0 %1250
        %1252 = vrot.lane.b32.xlu0 %v1232, 124
        %v1253 = vpop.permute.xlu0 %1252
        %1254 = vrot.lane.b32.xlu0 %v1233, 124
        %v1255 = vpop.permute.xlu0 %1254
        %1256 = vrot.lane.b32.xlu0 %v1234, 124
        %v1257 = vpop.permute.xlu0 %1256
        %1258 = vrot.lane.b32.xlu0 %v1235, 124
        %v1259 = vpop.permute.xlu0 %1258
        %v1268 = vadd.f32 %v1200, %v1245
        %v1269 = vadd.f32 %v1201, %v1247
        %v1270 = vadd.f32 %v1202, %v1249
        %v1271 = vadd.f32 %v1203, %v1251
        %v1272 = vadd.f32 %v1204, %v1253
        %v1273 = vadd.f32 %v1205, %v1255
        %v1274 = vadd.f32 %v1206, %v1257
        %v1275 = vadd.f32 %v1207, %v1259
        %s1276 = sadd.s32 0, 3
        %s1277 = scalar_lea.vmem [#allocation2], %s1276
        %v1278 = vld [vmem:[%s1277] sm:$0xff]
        %v1279 = vld [vmem:[%s1277 + $0x8] sm:$0xff]
        %v1280 = vld [vmem:[%s1277 + $0x18] sm:$0xff]
        %v1281 = vld [vmem:[%s1277 + $0x20] sm:$0xff]
        %v1282 = vld [vmem:[%s1277 + $0x30] sm:$0xff]
        %v1283 = vld [vmem:[%s1277 + $0x38] sm:$0xff]
        %v1284 = vld [vmem:[%s1277 + $0x48] sm:$0xff]
        %v1285 = vld [vmem:[%s1277 + $0x50] sm:$0xff]
        %v1286 = vrot.slane %v328, 3
        %v1287 = vrot.slane %v329, 3
        %v1288 = vrot.slane %v330, 3
        %v1289 = vrot.slane %v331, 3
        %s1290 = vtos %v1286
        %v1291 = vstv %s1290
        %s1293 = vtos %v1287
        %v1294 = vstv %s1293
        %s1296 = vtos %v1288
        %v1297 = vstv %s1296
        %s1299 = vtos %v1289
        %v1300 = vstv %s1299
        %v1302 = vmul.f32 %v1278, %v1291
        %v1303 = vmul.f32 %v1279, %v1291
        %v1304 = vmul.f32 %v1280, %v1294
        %v1305 = vmul.f32 %v1281, %v1294
        %v1306 = vmul.f32 %v1282, %v1297
        %v1307 = vmul.f32 %v1283, %v1297
        %v1308 = vmul.f32 %v1284, %v1300
        %v1309 = vmul.f32 %v1285, %v1300
        %v1310 = vadd.f32 %v1268, %v1302
        %v1311 = vadd.f32 %v1269, %v1303
        %v1312 = vadd.f32 %v1270, %v1304
        %v1313 = vadd.f32 %v1271, %v1305
        %v1314 = vadd.f32 %v1272, %v1306
        %v1315 = vadd.f32 %v1273, %v1307
        %v1316 = vadd.f32 %v1274, %v1308
        %v1317 = vadd.f32 %v1275, %v1309
        %1318 = vrot.lane.b32.xlu0 %v1286, 127
        %v1319 = vpop.permute.xlu0 %1318
        %1320 = vrot.lane.b32.xlu0 %v1287, 127
        %v1321 = vpop.permute.xlu0 %1320
        %1322 = vrot.lane.b32.xlu0 %v1288, 127
        %v1323 = vpop.permute.xlu0 %1322
        %1324 = vrot.lane.b32.xlu0 %v1289, 127
        %v1325 = vpop.permute.xlu0 %1324
        %s1326 = vtos %v1319
        %v1327 = vstv %s1326
        %s1329 = vtos %v1321
        %v1330 = vstv %s1329
        %s1332 = vtos %v1323
        %v1333 = vstv %s1332
        %s1335 = vtos %v1325
        %v1336 = vstv %s1335
        %v1338 = vmul.f32 %v1278, %v1327
        %v1339 = vmul.f32 %v1279, %v1327
        %v1340 = vmul.f32 %v1280, %v1330
        %v1341 = vmul.f32 %v1281, %v1330
        %v1342 = vmul.f32 %v1282, %v1333
        %v1343 = vmul.f32 %v1283, %v1333
        %v1344 = vmul.f32 %v1284, %v1336
        %v1345 = vmul.f32 %v1285, %v1336
        %1354 = vrot.lane.b32.xlu0 %v1338, 127
        %v1355 = vpop.permute.xlu0 %1354
        %1356 = vrot.lane.b32.xlu0 %v1339, 127
        %v1357 = vpop.permute.xlu0 %1356
        %1358 = vrot.lane.b32.xlu0 %v1340, 127
        %v1359 = vpop.permute.xlu0 %1358
        %1360 = vrot.lane.b32.xlu0 %v1341, 127
        %v1361 = vpop.permute.xlu0 %1360
        %1362 = vrot.lane.b32.xlu0 %v1342, 127
        %v1363 = vpop.permute.xlu0 %1362
        %1364 = vrot.lane.b32.xlu0 %v1343, 127
        %v1365 = vpop.permute.xlu0 %1364
        %1366 = vrot.lane.b32.xlu0 %v1344, 127
        %v1367 = vpop.permute.xlu0 %1366
        %1368 = vrot.lane.b32.xlu0 %v1345, 127
        %v1369 = vpop.permute.xlu0 %1368
        %v1378 = vadd.f32 %v1310, %v1355
        %v1379 = vadd.f32 %v1311, %v1357
        %v1380 = vadd.f32 %v1312, %v1359
        %v1381 = vadd.f32 %v1313, %v1361
        %v1382 = vadd.f32 %v1314, %v1363
        %v1383 = vadd.f32 %v1315, %v1365
        %v1384 = vadd.f32 %v1316, %v1367
        %v1385 = vadd.f32 %v1317, %v1369
        %1386 = vrot.lane.b32.xlu0 %v1286, 126
        %v1387 = vpop.permute.xlu0 %1386
        %1388 = vrot.lane.b32.xlu0 %v1287, 126
        %v1389 = vpop.permute.xlu0 %1388
        %1390 = vrot.lane.b32.xlu0 %v1288, 126
        %v1391 = vpop.permute.xlu0 %1390
        %1392 = vrot.lane.b32.xlu0 %v1289, 126
        %v1393 = vpop.permute.xlu0 %1392
        %s1394 = vtos %v1387
        %v1395 = vstv %s1394
        %s1397 = vtos %v1389
        %v1398 = vstv %s1397
        %s1400 = vtos %v1391
        %v1401 = vstv %s1400
        %s1403 = vtos %v1393
        %v1404 = vstv %s1403
        %v1406 = vmul.f32 %v1278, %v1395
        %v1407 = vmul.f32 %v1279, %v1395
        %v1408 = vmul.f32 %v1280, %v1398
        %v1409 = vmul.f32 %v1281, %v1398
        %v1410 = vmul.f32 %v1282, %v1401
        %v1411 = vmul.f32 %v1283, %v1401
        %v1412 = vmul.f32 %v1284, %v1404
        %v1413 = vmul.f32 %v1285, %v1404
        %1422 = vrot.lane.b32.xlu0 %v1406, 126
        %v1423 = vpop.permute.xlu0 %1422
        %1424 = vrot.lane.b32.xlu0 %v1407, 126
        %v1425 = vpop.permute.xlu0 %1424
        %1426 = vrot.lane.b32.xlu0 %v1408, 126
        %v1427 = vpop.permute.xlu0 %1426
        %1428 = vrot.lane.b32.xlu0 %v1409, 126
        %v1429 = vpop.permute.xlu0 %1428
        %1430 = vrot.lane.b32.xlu0 %v1410, 126
        %v1431 = vpop.permute.xlu0 %1430
        %1432 = vrot.lane.b32.xlu0 %v1411, 126
        %v1433 = vpop.permute.xlu0 %1432
        %1434 = vrot.lane.b32.xlu0 %v1412, 126
        %v1435 = vpop.permute.xlu0 %1434
        %1436 = vrot.lane.b32.xlu0 %v1413, 126
        %v1437 = vpop.permute.xlu0 %1436
        %v1446 = vadd.f32 %v1378, %v1423
        %v1447 = vadd.f32 %v1379, %v1425
        %v1448 = vadd.f32 %v1380, %v1427
        %v1449 = vadd.f32 %v1381, %v1429
        %v1450 = vadd.f32 %v1382, %v1431
        %v1451 = vadd.f32 %v1383, %v1433
        %v1452 = vadd.f32 %v1384, %v1435
        %v1453 = vadd.f32 %v1385, %v1437
        %1454 = vrot.lane.b32.xlu0 %v1286, 125
        %v1455 = vpop.permute.xlu0 %1454
        %1456 = vrot.lane.b32.xlu0 %v1287, 125
        %v1457 = vpop.permute.xlu0 %1456
        %1458 = vrot.lane.b32.xlu0 %v1288, 125
        %v1459 = vpop.permute.xlu0 %1458
        %1460 = vrot.lane.b32.xlu0 %v1289, 125
        %v1461 = vpop.permute.xlu0 %1460
        %s1462 = vtos %v1455
        %v1463 = vstv %s1462
        %s1465 = vtos %v1457
        %v1466 = vstv %s1465
        %s1468 = vtos %v1459
        %v1469 = vstv %s1468
        %s1471 = vtos %v1461
        %v1472 = vstv %s1471
        %v1474 = vmul.f32 %v1278, %v1463
        %v1475 = vmul.f32 %v1279, %v1463
        %v1476 = vmul.f32 %v1280, %v1466
        %v1477 = vmul.f32 %v1281, %v1466
        %v1478 = vmul.f32 %v1282, %v1469
        %v1479 = vmul.f32 %v1283, %v1469
        %v1480 = vmul.f32 %v1284, %v1472
        %v1481 = vmul.f32 %v1285, %v1472
        %1490 = vrot.lane.b32.xlu0 %v1474, 125
        %v1491 = vpop.permute.xlu0 %1490
        %1492 = vrot.lane.b32.xlu0 %v1475, 125
        %v1493 = vpop.permute.xlu0 %1492
        %1494 = vrot.lane.b32.xlu0 %v1476, 125
        %v1495 = vpop.permute.xlu0 %1494
        %1496 = vrot.lane.b32.xlu0 %v1477, 125
        %v1497 = vpop.permute.xlu0 %1496
        %1498 = vrot.lane.b32.xlu0 %v1478, 125
        %v1499 = vpop.permute.xlu0 %1498
        %1500 = vrot.lane.b32.xlu0 %v1479, 125
        %v1501 = vpop.permute.xlu0 %1500
        %1502 = vrot.lane.b32.xlu0 %v1480, 125
        %v1503 = vpop.permute.xlu0 %1502
        %1504 = vrot.lane.b32.xlu0 %v1481, 125
        %v1505 = vpop.permute.xlu0 %1504
        %v1514 = vadd.f32 %v1446, %v1491
        %v1515 = vadd.f32 %v1447, %v1493
        %v1516 = vadd.f32 %v1448, %v1495
        %v1517 = vadd.f32 %v1449, %v1497
        %v1518 = vadd.f32 %v1450, %v1499
        %v1519 = vadd.f32 %v1451, %v1501
        %v1520 = vadd.f32 %v1452, %v1503
        %v1521 = vadd.f32 %v1453, %v1505
        %1522 = vrot.lane.b32.xlu0 %v1286, 124
        %v1523 = vpop.permute.xlu0 %1522
        %1524 = vrot.lane.b32.xlu0 %v1287, 124
        %v1525 = vpop.permute.xlu0 %1524
        %1526 = vrot.lane.b32.xlu0 %v1288, 124
        %v1527 = vpop.permute.xlu0 %1526
        %1528 = vrot.lane.b32.xlu0 %v1289, 124
        %v1529 = vpop.permute.xlu0 %1528
        %s1530 = vtos %v1523
        %v1531 = vstv %s1530
        %s1533 = vtos %v1525
        %v1534 = vstv %s1533
        %s1536 = vtos %v1527
        %v1537 = vstv %s1536
        %s1539 = vtos %v1529
        %v1540 = vstv %s1539
        %v1542 = vmul.f32 %v1278, %v1531
        %v1543 = vmul.f32 %v1279, %v1531
        %v1544 = vmul.f32 %v1280, %v1534
        %v1545 = vmul.f32 %v1281, %v1534
        %v1546 = vmul.f32 %v1282, %v1537
        %v1547 = vmul.f32 %v1283, %v1537
        %v1548 = vmul.f32 %v1284, %v1540
        %v1549 = vmul.f32 %v1285, %v1540
        %1558 = vrot.lane.b32.xlu0 %v1542, 124
        %v1559 = vpop.permute.xlu0 %1558
        %1560 = vrot.lane.b32.xlu0 %v1543, 124
        %v1561 = vpop.permute.xlu0 %1560
        %1562 = vrot.lane.b32.xlu0 %v1544, 124
        %v1563 = vpop.permute.xlu0 %1562
        %1564 = vrot.lane.b32.xlu0 %v1545, 124
        %v1565 = vpop.permute.xlu0 %1564
        %1566 = vrot.lane.b32.xlu0 %v1546, 124
        %v1567 = vpop.permute.xlu0 %1566
        %1568 = vrot.lane.b32.xlu0 %v1547, 124
        %v1569 = vpop.permute.xlu0 %1568
        %1570 = vrot.lane.b32.xlu0 %v1548, 124
        %v1571 = vpop.permute.xlu0 %1570
        %1572 = vrot.lane.b32.xlu0 %v1549, 124
        %v1573 = vpop.permute.xlu0 %1572
        %v1582 = vadd.f32 %v1514, %v1559
        %v1583 = vadd.f32 %v1515, %v1561
        %v1584 = vadd.f32 %v1516, %v1563
        %v1585 = vadd.f32 %v1517, %v1565
        %v1586 = vadd.f32 %v1518, %v1567
        %v1587 = vadd.f32 %v1519, %v1569
        %v1588 = vadd.f32 %v1520, %v1571
        %v1589 = vadd.f32 %v1521, %v1573
        %s1590 = sadd.s32 0, 4
        %s1591 = scalar_lea.vmem [#allocation2], %s1590
        %v1592 = vld [vmem:[%s1591] sm:$0xff]
        %v1593 = vld [vmem:[%s1591 + $0x8] sm:$0xff]
        %v1594 = vld [vmem:[%s1591 + $0x18] sm:$0xff]
        %v1595 = vld [vmem:[%s1591 + $0x20] sm:$0xff]
        %v1596 = vld [vmem:[%s1591 + $0x30] sm:$0xff]
        %v1597 = vld [vmem:[%s1591 + $0x38] sm:$0xff]
        %v1598 = vld [vmem:[%s1591 + $0x48] sm:$0xff]
        %v1599 = vld [vmem:[%s1591 + $0x50] sm:$0xff]
        %v1600 = vrot.slane %v328, 4
        %v1601 = vrot.slane %v329, 4
        %v1602 = vrot.slane %v330, 4
        %v1603 = vrot.slane %v331, 4
        %s1604 = vtos %v1600
        %v1605 = vstv %s1604
        %s1607 = vtos %v1601
        %v1608 = vstv %s1607
        %s1610 = vtos %v1602
        %v1611 = vstv %s1610
        %s1613 = vtos %v1603
        %v1614 = vstv %s1613
        %v1616 = vmul.f32 %v1592, %v1605
        %v1617 = vmul.f32 %v1593, %v1605
        %v1618 = vmul.f32 %v1594, %v1608
        %v1619 = vmul.f32 %v1595, %v1608
        %v1620 = vmul.f32 %v1596, %v1611
        %v1621 = vmul.f32 %v1597, %v1611
        %v1622 = vmul.f32 %v1598, %v1614
        %v1623 = vmul.f32 %v1599, %v1614
        %v1624 = vadd.f32 %v1582, %v1616
        %v1625 = vadd.f32 %v1583, %v1617
        %v1626 = vadd.f32 %v1584, %v1618
        %v1627 = vadd.f32 %v1585, %v1619
        %v1628 = vadd.f32 %v1586, %v1620
        %v1629 = vadd.f32 %v1587, %v1621
        %v1630 = vadd.f32 %v1588, %v1622
        %v1631 = vadd.f32 %v1589, %v1623
        %1632 = vrot.lane.b32.xlu0 %v1600, 127
        %v1633 = vpop.permute.xlu0 %1632
        %1634 = vrot.lane.b32.xlu0 %v1601, 127
        %v1635 = vpop.permute.xlu0 %1634
        %1636 = vrot.lane.b32.xlu0 %v1602, 127
        %v1637 = vpop.permute.xlu0 %1636
        %1638 = vrot.lane.b32.xlu0 %v1603, 127
        %v1639 = vpop.permute.xlu0 %1638
        %s1640 = vtos %v1633
        %v1641 = vstv %s1640
        %s1643 = vtos %v1635
        %v1644 = vstv %s1643
        %s1646 = vtos %v1637
        %v1647 = vstv %s1646
        %s1649 = vtos %v1639
        %v1650 = vstv %s1649
        %v1652 = vmul.f32 %v1592, %v1641
        %v1653 = vmul.f32 %v1593, %v1641
        %v1654 = vmul.f32 %v1594, %v1644
        %v1655 = vmul.f32 %v1595, %v1644
        %v1656 = vmul.f32 %v1596, %v1647
        %v1657 = vmul.f32 %v1597, %v1647
        %v1658 = vmul.f32 %v1598, %v1650
        %v1659 = vmul.f32 %v1599, %v1650
        %1668 = vrot.lane.b32.xlu0 %v1652, 127
        %v1669 = vpop.permute.xlu0 %1668
        %1670 = vrot.lane.b32.xlu0 %v1653, 127
        %v1671 = vpop.permute.xlu0 %1670
        %1672 = vrot.lane.b32.xlu0 %v1654, 127
        %v1673 = vpop.permute.xlu0 %1672
        %1674 = vrot.lane.b32.xlu0 %v1655, 127
        %v1675 = vpop.permute.xlu0 %1674
        %1676 = vrot.lane.b32.xlu0 %v1656, 127
        %v1677 = vpop.permute.xlu0 %1676
        %1678 = vrot.lane.b32.xlu0 %v1657, 127
        %v1679 = vpop.permute.xlu0 %1678
        %1680 = vrot.lane.b32.xlu0 %v1658, 127
        %v1681 = vpop.permute.xlu0 %1680
        %1682 = vrot.lane.b32.xlu0 %v1659, 127
        %v1683 = vpop.permute.xlu0 %1682
        %v1692 = vadd.f32 %v1624, %v1669
        %v1693 = vadd.f32 %v1625, %v1671
        %v1694 = vadd.f32 %v1626, %v1673
        %v1695 = vadd.f32 %v1627, %v1675
        %v1696 = vadd.f32 %v1628, %v1677
        %v1697 = vadd.f32 %v1629, %v1679
        %v1698 = vadd.f32 %v1630, %v1681
        %v1699 = vadd.f32 %v1631, %v1683
        %1700 = vrot.lane.b32.xlu0 %v1600, 126
        %v1701 = vpop.permute.xlu0 %1700
        %1702 = vrot.lane.b32.xlu0 %v1601, 126
        %v1703 = vpop.permute.xlu0 %1702
        %1704 = vrot.lane.b32.xlu0 %v1602, 126
        %v1705 = vpop.permute.xlu0 %1704
        %1706 = vrot.lane.b32.xlu0 %v1603, 126
        %v1707 = vpop.permute.xlu0 %1706
        %s1708 = vtos %v1701
        %v1709 = vstv %s1708
        %s1711 = vtos %v1703
        %v1712 = vstv %s1711
        %s1714 = vtos %v1705
        %v1715 = vstv %s1714
        %s1717 = vtos %v1707
        %v1718 = vstv %s1717
        %v1720 = vmul.f32 %v1592, %v1709
        %v1721 = vmul.f32 %v1593, %v1709
        %v1722 = vmul.f32 %v1594, %v1712
        %v1723 = vmul.f32 %v1595, %v1712
        %v1724 = vmul.f32 %v1596, %v1715
        %v1725 = vmul.f32 %v1597, %v1715
        %v1726 = vmul.f32 %v1598, %v1718
        %v1727 = vmul.f32 %v1599, %v1718
        %1736 = vrot.lane.b32.xlu0 %v1720, 126
        %v1737 = vpop.permute.xlu0 %1736
        %1738 = vrot.lane.b32.xlu0 %v1721, 126
        %v1739 = vpop.permute.xlu0 %1738
        %1740 = vrot.lane.b32.xlu0 %v1722, 126
        %v1741 = vpop.permute.xlu0 %1740
        %1742 = vrot.lane.b32.xlu0 %v1723, 126
        %v1743 = vpop.permute.xlu0 %1742
        %1744 = vrot.lane.b32.xlu0 %v1724, 126
        %v1745 = vpop.permute.xlu0 %1744
        %1746 = vrot.lane.b32.xlu0 %v1725, 126
        %v1747 = vpop.permute.xlu0 %1746
        %1748 = vrot.lane.b32.xlu0 %v1726, 126
        %v1749 = vpop.permute.xlu0 %1748
        %1750 = vrot.lane.b32.xlu0 %v1727, 126
        %v1751 = vpop.permute.xlu0 %1750
        %v1760 = vadd.f32 %v1692, %v1737
        %v1761 = vadd.f32 %v1693, %v1739
        %v1762 = vadd.f32 %v1694, %v1741
        %v1763 = vadd.f32 %v1695, %v1743
        %v1764 = vadd.f32 %v1696, %v1745
        %v1765 = vadd.f32 %v1697, %v1747
        %v1766 = vadd.f32 %v1698, %v1749
        %v1767 = vadd.f32 %v1699, %v1751
        %1768 = vrot.lane.b32.xlu0 %v1600, 125
        %v1769 = vpop.permute.xlu0 %1768
        %1770 = vrot.lane.b32.xlu0 %v1601, 125
        %v1771 = vpop.permute.xlu0 %1770
        %1772 = vrot.lane.b32.xlu0 %v1602, 125
        %v1773 = vpop.permute.xlu0 %1772
        %1774 = vrot.lane.b32.xlu0 %v1603, 125
        %v1775 = vpop.permute.xlu0 %1774
        %s1776 = vtos %v1769
        %v1777 = vstv %s1776
        %s1779 = vtos %v1771
        %v1780 = vstv %s1779
        %s1782 = vtos %v1773
        %v1783 = vstv %s1782
        %s1785 = vtos %v1775
        %v1786 = vstv %s1785
        %v1788 = vmul.f32 %v1592, %v1777
        %v1789 = vmul.f32 %v1593, %v1777
        %v1790 = vmul.f32 %v1594, %v1780
        %v1791 = vmul.f32 %v1595, %v1780
        %v1792 = vmul.f32 %v1596, %v1783
        %v1793 = vmul.f32 %v1597, %v1783
        %v1794 = vmul.f32 %v1598, %v1786
        %v1795 = vmul.f32 %v1599, %v1786
        %1804 = vrot.lane.b32.xlu0 %v1788, 125
        %v1805 = vpop.permute.xlu0 %1804
        %1806 = vrot.lane.b32.xlu0 %v1789, 125
        %v1807 = vpop.permute.xlu0 %1806
        %1808 = vrot.lane.b32.xlu0 %v1790, 125
        %v1809 = vpop.permute.xlu0 %1808
        %1810 = vrot.lane.b32.xlu0 %v1791, 125
        %v1811 = vpop.permute.xlu0 %1810
        %1812 = vrot.lane.b32.xlu0 %v1792, 125
        %v1813 = vpop.permute.xlu0 %1812
        %1814 = vrot.lane.b32.xlu0 %v1793, 125
        %v1815 = vpop.permute.xlu0 %1814
        %1816 = vrot.lane.b32.xlu0 %v1794, 125
        %v1817 = vpop.permute.xlu0 %1816
        %1818 = vrot.lane.b32.xlu0 %v1795, 125
        %v1819 = vpop.permute.xlu0 %1818
        %v1828 = vadd.f32 %v1760, %v1805
        %v1829 = vadd.f32 %v1761, %v1807
        %v1830 = vadd.f32 %v1762, %v1809
        %v1831 = vadd.f32 %v1763, %v1811
        %v1832 = vadd.f32 %v1764, %v1813
        %v1833 = vadd.f32 %v1765, %v1815
        %v1834 = vadd.f32 %v1766, %v1817
        %v1835 = vadd.f32 %v1767, %v1819
        %1836 = vrot.lane.b32.xlu0 %v1600, 124
        %v1837 = vpop.permute.xlu0 %1836
        %1838 = vrot.lane.b32.xlu0 %v1601, 124
        %v1839 = vpop.permute.xlu0 %1838
        %1840 = vrot.lane.b32.xlu0 %v1602, 124
        %v1841 = vpop.permute.xlu0 %1840
        %1842 = vrot.lane.b32.xlu0 %v1603, 124
        %v1843 = vpop.permute.xlu0 %1842
        %s1844 = vtos %v1837
        %v1845 = vstv %s1844
        %s1847 = vtos %v1839
        %v1848 = vstv %s1847
        %s1850 = vtos %v1841
        %v1851 = vstv %s1850
        %s1853 = vtos %v1843
        %v1854 = vstv %s1853
        %v1856 = vmul.f32 %v1592, %v1845
        %v1857 = vmul.f32 %v1593, %v1845
        %v1858 = vmul.f32 %v1594, %v1848
        %v1859 = vmul.f32 %v1595, %v1848
        %v1860 = vmul.f32 %v1596, %v1851
        %v1861 = vmul.f32 %v1597, %v1851
        %v1862 = vmul.f32 %v1598, %v1854
        %v1863 = vmul.f32 %v1599, %v1854
        %1872 = vrot.lane.b32.xlu0 %v1856, 124
        %v1873 = vpop.permute.xlu0 %1872
        %1874 = vrot.lane.b32.xlu0 %v1857, 124
        %v1875 = vpop.permute.xlu0 %1874
        %1876 = vrot.lane.b32.xlu0 %v1858, 124
        %v1877 = vpop.permute.xlu0 %1876
        %1878 = vrot.lane.b32.xlu0 %v1859, 124
        %v1879 = vpop.permute.xlu0 %1878
        %1880 = vrot.lane.b32.xlu0 %v1860, 124
        %v1881 = vpop.permute.xlu0 %1880
        %1882 = vrot.lane.b32.xlu0 %v1861, 124
        %v1883 = vpop.permute.xlu0 %1882
        %1884 = vrot.lane.b32.xlu0 %v1862, 124
        %v1885 = vpop.permute.xlu0 %1884
        %1886 = vrot.lane.b32.xlu0 %v1863, 124
        %v1887 = vpop.permute.xlu0 %1886
        %v1896 = vadd.f32 %v1828, %v1873
        %v1897 = vadd.f32 %v1829, %v1875
        %v1898 = vadd.f32 %v1830, %v1877
        %v1899 = vadd.f32 %v1831, %v1879
        %v1900 = vadd.f32 %v1832, %v1881
        %v1901 = vadd.f32 %v1833, %v1883
        %v1902 = vadd.f32 %v1834, %v1885
        %v1903 = vadd.f32 %v1835, %v1887
        %v1908 = vlaneseq
        %v1909 = vshrl.u32 %v1908, 7
        %v1910 = vsub.s32 0, %v1909
        %v1911 = vrot.slane %v332, %v1910
        %v1912 = vlaneseq
        %v1913 = vshrl.u32 %v1912, 7
        %v1914 = vsub.s32 0, %v1913
        %v1915 = vrot.slane %v333, %v1914
        %v1916 = vlaneseq
        %v1917 = vshrl.u32 %v1916, 7
        %v1918 = vsub.s32 0, %v1917
        %v1919 = vrot.slane %v334, %v1918
        %v1920 = vlaneseq
        %v1921 = vshrl.u32 %v1920, 7
        %v1922 = vsub.s32 0, %v1921
        %v1923 = vrot.slane %v335, %v1922
        %1924 = vset.pattern.permute.xlu0 0
        %1925 = vperm.xlu0 %1924, %v1911
        %v1926 = vpop.permute.xlu0 %1925
        %1928 = vset.pattern.permute.xlu0 0
        %1929 = vperm.xlu0 %1928, %v1915
        %v1930 = vpop.permute.xlu0 %1929
        %1932 = vset.pattern.permute.xlu0 0
        %1933 = vperm.xlu0 %1932, %v1919
        %v1934 = vpop.permute.xlu0 %1933
        %1936 = vset.pattern.permute.xlu0 0
        %1937 = vperm.xlu0 %1936, %v1923
        %v1938 = vpop.permute.xlu0 %1937
        %v1940 = vadd.f32 %v1896, %v1926
        %v1941 = vadd.f32 %v1897, %v1926
        %v1942 = vadd.f32 %v1898, %v1930
        %v1943 = vadd.f32 %v1899, %v1930
        %v1944 = vadd.f32 %v1900, %v1934
        %v1945 = vadd.f32 %v1901, %v1934
        %v1946 = vadd.f32 %v1902, %v1938
        %v1947 = vadd.f32 %v1903, %v1938
        %v1948 = vxor.u32 %v1940, 2147483648
        %v1949 = vxor.u32 %v1941, 2147483648
        %v1950 = vxor.u32 %v1942, 2147483648
        %v1951 = vxor.u32 %v1943, 2147483648
        %v1952 = vxor.u32 %v1944, 2147483648
        %v1953 = vxor.u32 %v1945, 2147483648
        %v1954 = vxor.u32 %v1946, 2147483648
        %v1955 = vxor.u32 %v1947, 2147483648
        %v1956 = vmul.f32 %v1948, 1.442695
        %v1957 = vpow.pop %v1956
        %v1958 = vmul.f32 %v1949, 1.442695
        %v1959 = vpow.pop %v1958
        %v1960 = vmul.f32 %v1950, 1.442695
        %v1961 = vpow.pop %v1960
        %v1962 = vmul.f32 %v1951, 1.442695
        %v1963 = vpow.pop %v1962
        %v1964 = vmul.f32 %v1952, 1.442695
        %v1965 = vpow.pop %v1964
        %v1966 = vmul.f32 %v1953, 1.442695
        %v1967 = vpow.pop %v1966
        %v1968 = vmul.f32 %v1954, 1.442695
        %v1969 = vpow.pop %v1968
        %v1970 = vmul.f32 %v1955, 1.442695
        %v1971 = vpow.pop %v1970
        %v1972 = vadd.f32 %v1957, 1.0
        %v1973 = vadd.f32 %v1959, 1.0
        %v1974 = vadd.f32 %v1961, 1.0
        %v1975 = vadd.f32 %v1963, 1.0
        %v1976 = vadd.f32 %v1965, 1.0
        %v1977 = vadd.f32 %v1967, 1.0
        %v1978 = vadd.f32 %v1969, 1.0
        %v1979 = vadd.f32 %v1971, 1.0
        %v1980 = vrcp.pop %v1972
        %v1981 = vmul.f32 1.0, %v1980
        %v1982 = vrcp.pop %v1973
        %v1983 = vmul.f32 1.0, %v1982
        %v1984 = vrcp.pop %v1974
        %v1985 = vmul.f32 1.0, %v1984
        %v1986 = vrcp.pop %v1975
        %v1987 = vmul.f32 1.0, %v1986
        %v1988 = vrcp.pop %v1976
        %v1989 = vmul.f32 1.0, %v1988
        %v1990 = vrcp.pop %v1977
        %v1991 = vmul.f32 1.0, %v1990
        %v1992 = vrcp.pop %v1978
        %v1993 = vmul.f32 1.0, %v1992
        %v1994 = vrcp.pop %v1979
        %v1995 = vmul.f32 1.0, %v1994
        %v1996 = vmul.f32 %v1940, %v1981
        %v1997 = vmul.f32 %v1941, %v1983
        %v1998 = vmul.f32 %v1942, %v1985
        %v1999 = vmul.f32 %v1943, %v1987
        %v2000 = vmul.f32 %v1944, %v1989
        %v2001 = vmul.f32 %v1945, %v1991
        %v2002 = vmul.f32 %v1946, %v1993
        %v2003 = vmul.f32 %v1947, %v1995
        %s2004 = sadd.s32 0, 64
        %s2005 = scalar_lea.vmem %s220, %s2004 [#allocation3]
        %2006 = vst.msk [vmem:[%s2005] sm:$0xff] %vm278, %v1996
        %2007 = vst.msk [vmem:[%s2005 + $0x8] sm:$0xff] %vm278, %v1997
        %2008 = vst.msk [vmem:[%s2005 + $0x10] sm:$0xff] %vm278, %v1998
        %2009 = vst.msk [vmem:[%s2005 + $0x18] sm:$0xff] %vm278, %v1999
        %2010 = vst.msk [vmem:[%s2005 + $0x20] sm:$0xff] %vm278, %v2000
        %2011 = vst.msk [vmem:[%s2005 + $0x28] sm:$0xff] %vm278, %v2001
        %2012 = vst.msk [vmem:[%s2005 + $0x30] sm:$0xff] %vm278, %v2002
        %2013 = vst.msk [vmem:[%s2005 + $0x38] sm:$0xff] %vm278, %v2003
        %s2014 = sand.u32 %s119, 1
        %s2015 = scalar_lea.sflag [#allocation4], %s2014
        %s2016 = sand.u32 %s119, 1
        %s2017 = smul.addr %s2016, 128
        %s2018 = scalar_lea.vmem [#allocation3], %s2017
        // Predicated region
        $region33: #{_ghost_conv_forward.3} parent=31 // pred_check
          %p2019 = pneg %p129
        $region34: #{_ghost_conv_forward.3} parent=31 // pred_check_branch
          %2021 = sbr.rel (%p2019) target = $region36
        $region35: #{_ghost_conv_forward.3} parent=31 // pred_region
          %s2022 = smul.u32 4, %s22
          %s2024 = ssub.s32 2048, 2048
          %2025 = vsyncadd %s2015, %s2024
          %s2026 = smul.addr %s2022, 2
          %s2027 = smul.addr %s21, 16
          %s2028 = sadd.s32 %s2026, %s2027
          %s2029 = smul.addr %s2028, 128
          %s2030 = scalar_lea.hbm %s3, %s2029
          %s2031 = sshll.u32 %s2018, 4
          %s2032 = int_to_ptr.vmem [resolvable:$true] %s2031
          %2037 = dma.vmem_to_hbm [thread:$0]  %s2032, 2048, %s2030, %s2015, 128, 128, 8
        $region36: #{_ghost_conv_forward.3} parent=31 // pred_fallthru
          _
      $region32: #{_ghost_conv_forward.3} parent=5 // pred_fallthru
        _
      %p2038 = scmp.le.s32.totalorder 2, %s12
      // Predicated region
      $region37: #{_ghost_conv_forward.3} parent=5 // pred_check
        %p2039 = pneg %p2038
      $region38: #{_ghost_conv_forward.3} parent=5 // pred_check_branch
        %2041 = sbr.rel (%p2039) target = $region40
      $region39: #{_ghost_conv_forward.3} parent=5 // pred_region
        %s2042 = ssub.s32 %s12, 2
        // Predicated region
        $region41: #{_ghost_conv_forward.3} parent=39 // pred_check
          %p2043 = pneg %p135
        $region42: #{_ghost_conv_forward.3} parent=39 // pred_check_branch
          %2045 = sbr.rel (%p2043) target = $region44
        $region43: #{_ghost_conv_forward.3} parent=39 // pred_region
          %s2046 = sand.u32 %s120, 1
          %s2047 = scalar_lea.sflag [#allocation4], %s2046
          %s2048 = sand.u32 %s120, 1
          %s2049 = smul.addr %s2048, 128
          %s2050 = scalar_lea.vmem [#allocation3], %s2049
          %2051 = dma.done %s2047, 2048
        $region44: #{_ghost_conv_forward.3} parent=39 // pred_fallthru
          _
      $region40: #{_ghost_conv_forward.3} parent=5 // pred_fallthru
        _
    $region6: #{_ghost_conv_forward.3} parent=1 // loop_footer
      %s16 = sadd.s32 1, %s12
    $region7: #{_ghost_conv_forward.3} parent=1 // loop_footer_branch
      %11 = sbr.rel target = $region3
    $region8: #{_ghost_conv_forward.3} parent=1 // loop_exit
      _
    %2052 = vsyncpa [#allocation4], 1
    %s2053 = scalar_lea.sflag [#allocation4], 1
    %2054 = vsyncpa %s2053, 1

</llo_original>
